<compile_context>
chip_gen: v5e
topology: v5e:2x2
jax: 0.10.0
libtpu: 0.0.40
codegen_flags: <defaults>
</compile_context>

<pallas_src>
import jax
import jax.numpy as jnp
from jax.experimental import pallas as pl
from jax.experimental.pallas import tpu as pltpu

_LANE = 128
_BF16_SUBLANE = 16  # minimum bf16 tile is (16, 128)

# Cached capability probe: does this jax accept pipeline_mode=pl.Buffered(1)?
_SINGLE_BUFFER_WEIGHTS_OK = None


def _round_up(n, m):
    return ((n + m - 1) // m) * m


def _mlp_kernel(x_ref, w1_ref, b1_ref, w2_ref, b2_ref, o_ref):
    """One batch tile: relu(x @ w1 + b1) @ w2 + b2.

    Weights are pre-transposed to (in, out) layout, so both dots contract
    LHS dim 1 with RHS dim 0 (plain MXU matmul, no transpose).
    """
    xb = x_ref[...].astype(w1_ref.dtype)                 # bf16 cast on the VPU
    h = jnp.dot(xb, w1_ref[...],
                preferred_element_type=jnp.float32)      # (TILE_B, H_p) f32 acc
    h = jnp.maximum(h + b1_ref[...], 0.0)                # bias + clamp(min=0)
    y = jnp.dot(h.astype(w2_ref.dtype), w2_ref[...],
                preferred_element_type=jnp.float32)      # (TILE_B, D_out_p) f32 acc
    o_ref[...] = (y + b2_ref[...]).astype(o_ref.dtype)


def prepare_params(w1, b1, w2, b2, *, compute_dtype=jnp.bfloat16):
    """One-time weight prep (outside the hot path): transpose to (in, out) layout,
    pad to 128-multiples, cast MXU operands to bf16.  Biases stay f32."""
    H, D_in = w1.shape
    D_out, H2 = w2.shape
    assert H2 == H
    D_in_p = _round_up(D_in, _LANE)
    H_p = _round_up(H, _LANE)
    D_out_p = _round_up(D_out, _LANE)

    w1_t = jnp.zeros((D_in_p, H_p), compute_dtype).at[:D_in, :H].set(
        w1.T.astype(compute_dtype))
    w2_t = jnp.zeros((H_p, D_out_p), compute_dtype).at[:H, :D_out].set(
        w2.T.astype(compute_dtype))
    b1_p = jnp.zeros((1, H_p), jnp.float32).at[0, :H].set(b1.astype(jnp.float32))
    b2_p = jnp.zeros((1, D_out_p), jnp.float32).at[0, :D_out].set(
        b2.astype(jnp.float32))
    return dict(w1=w1_t, b1=b1_p, w2=w2_t, b2=b2_p,
                D_in=D_in, H=H, D_out=D_out, compute_dtype=compute_dtype)


def two_layer_net(x, params, *, tile_b=256, out_dtype=jnp.bfloat16):
    """Fused forward pass: relu(x @ w1.T + b1) @ w2.T + b2 (PyTorch semantics).

    x: (B, D_in) float32/bfloat16; params from prepare_params().
    Returns (B, D_out) in out_dtype (default bf16 to halve output writeback).
    """
    global _SINGLE_BUFFER_WEIGHTS_OK

    B, D_in = x.shape
    assert D_in == params["D_in"]
    w1, b1, w2, b2 = params["w1"], params["b1"], params["w2"], params["b2"]
    compute_dtype = params["compute_dtype"]
    D_in_p, H_p = w1.shape
    D_out_p = w2.shape[1]
    D_out = params["D_out"]

    # --- batch tiling: multiples of 16 (bf16 sublane packing), keep >= 2 grid steps
    # so the "parallel" axis shards across both TensorCores on v7x.
    b16 = _round_up(B, _BF16_SUBLANE)
    tile_b = max(_BF16_SUBLANE, min(_round_up(tile_b, _BF16_SUBLANE), b16))
    if b16 // tile_b < 2 and b16 >= 2 * _BF16_SUBLANE:
        tile_b = _round_up(pl.cdiv(b16, 2), _BF16_SUBLANE)
    B_p = _round_up(B, tile_b)

    # --- only materialize a padded copy of x when actually required; otherwise the
    # kernel reads x straight from HBM and casts to bf16 in-register.
    if B_p != B or D_in_p != D_in:
        x_in = jnp.zeros((B_p, D_in_p), compute_dtype).at[:B, :D_in].set(
            x.astype(compute_dtype))
    else:
        x_in = x

    grid = (B_p // tile_b,)

    x_isz = jnp.dtype(x_in.dtype).itemsize
    w_isz = jnp.dtype(compute_dtype).itemsize
    o_isz = jnp.dtype(out_dtype).itemsize

    # VMEM working set (conservative: weights counted double-buffered), clamped to
    # the real per-core VMEM capacity (64 MiB on v7x, 128 MiB on v5e/v6e).
    working = (2 * (w1.size + w2.size) * w_isz
               + 2 * (b1.size + b2.size) * 4
               + 2 * tile_b * D_in_p * x_isz       # double-buffered x tile
               + 2 * tile_b * D_out_p * o_isz      # double-buffered out tile
               + tile_b * H_p * 4                  # hidden activations (f32)
               + tile_b * D_out_p * 4)             # y before store (f32)
    try:
        vmem_cap = int(pltpu.get_tpu_info().vmem_capacity_bytes)
    except Exception:
        vmem_cap = 64 << 20                        # conservative (v7x per-core)
    vmem_limit = min(int(vmem_cap * 0.85),
                     max(int(working * 1.5) + (4 << 20), 16 << 20))

    flops = 2 * B_p * (D_in_p * H_p + H_p * D_out_p)
    bytes_accessed = (B_p * D_in_p * x_isz
                      + (w1.size + w2.size) * w_isz
                      + (b1.size + b2.size) * 4
                      + B_p * D_out_p * o_isz)
    cost = pl.CostEstimate(flops=flops, transcendentals=0,
                           bytes_accessed=bytes_accessed)

    def build(single_buffer_weights):
        def wspec(shape):
            if single_buffer_weights:
                return pl.BlockSpec(shape, lambda i: (0, 0),
                                    pipeline_mode=pl.Buffered(1))
            return pl.BlockSpec(shape, lambda i: (0, 0))

        return pl.pallas_call(
            _mlp_kernel,
            out_shape=jax.ShapeDtypeStruct((B_p, D_out_p), out_dtype),
            grid=grid,
            in_specs=[
                pl.BlockSpec((tile_b, D_in_p), lambda i: (i, 0)),  # x: batch-tiled
                wspec((D_in_p, H_p)),                              # w1: resident
                wspec((1, H_p)),                                   # b1: resident
                wspec((H_p, D_out_p)),                             # w2: resident
                wspec((1, D_out_p)),                               # b2: resident
            ],
            out_specs=pl.BlockSpec((tile_b, D_out_p), lambda i: (i, 0)),
            compiler_params=pltpu.CompilerParams(
                dimension_semantics=("parallel",),   # 2-TC sharding on v7x
                vmem_limit_bytes=vmem_limit),
            cost_estimate=cost,
        )

    args = (x_in, w1, b1, w2, b2)
    if _SINGLE_BUFFER_WEIGHTS_OK is None:
        try:
            out_p = build(True)(*args)
            _SINGLE_BUFFER_WEIGHTS_OK = True
        except Exception:
            _SINGLE_BUFFER_WEIGHTS_OK = False
            out_p = build(False)(*args)
    else:
        out_p = build(_SINGLE_BUFFER_WEIGHTS_OK)(*args)

    return out_p[:B, :D_out]


def _torch_linear_init(key, out_features, in_features):
    """Deterministic init matching torch.nn.Linear default (uniform +-1/sqrt(in))."""
    bound = 1.0 / jnp.sqrt(jnp.float32(in_features))
    k_w, k_b = jax.random.split(key)
    w = jax.random.uniform(k_w, (out_features, in_features),
                           minval=-bound, maxval=bound, dtype=jnp.float32)
    b = jax.random.uniform(k_b, (out_features,),
                           minval=-bound, maxval=bound, dtype=jnp.float32)
    return w, b


if __name__ == "__main__":
    # Shapes consistent with TwoLayerNet(D_in, H, D_out); B=256 exercises a 2-step
    # batch grid (tile_b auto-shrinks 256 -> 128 to keep 2 TC-shardable steps) and
    # D_out=32 exercises lane padding of the output.
    B, D_in, H, D_out = 256, 256, 128, 32

    key = jax.random.PRNGKey(0)
    k_x, k_l1, k_l2 = jax.random.split(key, 3)

    x = jax.random.normal(k_x, (B, D_in), dtype=jnp.float32)
    w1, b1 = _torch_linear_init(k_l1, H, D_in)
    w2, b2 = _torch_linear_init(k_l2, D_out, H)

    params = prepare_params(w1, b1, w2, b2)   # one-time: transpose + pad + bf16 cast
    y = two_layer_net(x, params)
    y = jax.block_until_ready(y)
    assert y.shape == (B, D_out)
    y32 = y.astype(jnp.float32)

    # Reference mimicking the kernel's bf16-in / f32-accumulate / bf16-out path.
    xb = x.astype(jnp.bfloat16).astype(jnp.float32)
    w1b = w1.astype(jnp.bfloat16).astype(jnp.float32)
    w2b = w2.astype(jnp.bfloat16).astype(jnp.float32)
    h_ref = jnp.maximum(xb @ w1b.T + b1, 0.0)
    y_ref = h_ref.astype(jnp.bfloat16).astype(jnp.float32) @ w2b.T + b2
    y_ref = y_ref.astype(jnp.bfloat16).astype(jnp.float32)
    assert jnp.allclose(y32, y_ref, atol=2e-2, rtol=2e-2)

    # Looser check against pure-f32 PyTorch semantics (precision contract: bf16 MXU
    # operands + bf16 output, f32 accumulation).
    y_f32 = jnp.maximum(x @ w1.T + b1, 0.0) @ w2.T + b2
    assert jnp.allclose(y32, y_f32, atol=5e-2, rtol=5e-2)

    print("KERNEL_OK")
</pallas_src>

<mosaic_0001>
module attributes {stable_mosaic.version = 11 : i64} {
  func.func @_mlp_kernel(%arg0: i32, %arg1: memref<128x256xf32, #tpu.memory_space<vmem>>, %arg2: memref<256x128xbf16, #tpu.memory_space<vmem>>, %arg3: memref<1x128xf32, #tpu.memory_space<vmem>>, %arg4: memref<128x128xbf16, #tpu.memory_space<vmem>>, %arg5: memref<1x128xf32, #tpu.memory_space<vmem>>, %arg6: memref<128x128xbf16, #tpu.memory_space<vmem>>) attributes {dimension_semantics = [#tpu.dimension_semantics<parallel>], iteration_bounds = array<i64: 2>, scalar_prefetch = 0 : i64, scratch_operands = 0 : i64, tpu.core_type = #tpu.core_type<tc>, window_params = [{transform_indices = @transform_0, window_bounds = array<i64: 128, 256>}, {pipeline_mode = #tpu.pipeline_mode<synchronous>, transform_indices = @transform_1, window_bounds = array<i64: 256, 128>}, {pipeline_mode = #tpu.pipeline_mode<synchronous>, transform_indices = @transform_2, window_bounds = array<i64: 1, 128>}, {pipeline_mode = #tpu.pipeline_mode<synchronous>, transform_indices = @transform_3, window_bounds = array<i64: 128, 128>}, {pipeline_mode = #tpu.pipeline_mode<synchronous>, transform_indices = @transform_4, window_bounds = array<i64: 1, 128>}, {transform_indices = @transform_5, window_bounds = array<i64: 128, 128>}]} {
    %c0 = arith.constant 0 : index
    %c0_0 = arith.constant 0 : index
    %0 = vector.load %arg1[%c0, %c0_0] : memref<128x256xf32, #tpu.memory_space<vmem>>, vector<128x256xf32>
    %1 = arith.truncf %0 : vector<128x256xf32> to vector<128x256xbf16>
    %c0_1 = arith.constant 0 : index
    %c0_2 = arith.constant 0 : index
    %2 = vector.load %arg2[%c0_1, %c0_2] : memref<256x128xbf16, #tpu.memory_space<vmem>>, vector<256x128xbf16>
    %cst = arith.constant dense<0.000000e+00> : vector<128x128xf32>
    %3 = tpu.matmul %1, %2, %cst {dimension_numbers = #tpu.dot_dimension_numbers<[1], [0], [0], [1], [0, 0, 1, 1], [], []>} : vector<128x256xbf16>, vector<256x128xbf16>, vector<128x128xf32> -> vector<128x128xf32>
    %c0_3 = arith.constant 0 : index
    %c0_4 = arith.constant 0 : index
    %4 = vector.load %arg3[%c0_3, %c0_4] : memref<1x128xf32, #tpu.memory_space<vmem>>, vector<1x128xf32>
    %5 = vector.broadcast %4 : vector<1x128xf32> to vector<128x128xf32>
    %6 = arith.addf %3, %5 : vector<128x128xf32>
    %cst_5 = arith.constant 0.000000e+00 : f32
    %7 = vector.broadcast %cst_5 : f32 to vector<128x128xf32>
    %8 = arith.maximumf %6, %7 : vector<128x128xf32>
    %9 = arith.truncf %8 : vector<128x128xf32> to vector<128x128xbf16>
    %c0_6 = arith.constant 0 : index
    %c0_7 = arith.constant 0 : index
    %10 = vector.load %arg4[%c0_6, %c0_7] : memref<128x128xbf16, #tpu.memory_space<vmem>>, vector<128x128xbf16>
    %cst_8 = arith.constant dense<0.000000e+00> : vector<128x128xf32>
    %11 = tpu.matmul %9, %10, %cst_8 {dimension_numbers = #tpu.dot_dimension_numbers<[1], [0], [0], [1], [0, 0, 1, 1], [], []>} : vector<128x128xbf16>, vector<128x128xbf16>, vector<128x128xf32> -> vector<128x128xf32>
    %c0_9 = arith.constant 0 : index
    %c0_10 = arith.constant 0 : index
    %12 = vector.load %arg5[%c0_9, %c0_10] : memref<1x128xf32, #tpu.memory_space<vmem>>, vector<1x128xf32>
    %13 = vector.broadcast %12 : vector<1x128xf32> to vector<128x128xf32>
    %14 = arith.addf %11, %13 : vector<128x128xf32>
    %15 = arith.truncf %14 : vector<128x128xf32> to vector<128x128xbf16>
    %c0_11 = arith.constant 0 : index
    %c0_12 = arith.constant 0 : index
    %16 = vector.load %arg6[%c0_11, %c0_12] : memref<128x128xbf16, #tpu.memory_space<vmem>>, vector<128x128xbf16>
    tpu.vector_store %arg6[%c0_11, %c0_12], %15 {strides = array<i32>} : memref<128x128xbf16, #tpu.memory_space<vmem>>, vector<128x128xbf16>,
    return
  }
  func.func @transform_0(%arg0: i32) -> (i32, i32) {
    %c0_i32 = arith.constant 0 : i32
    %c0_i32_0 = arith.constant 0 : i32
    return %arg0, %c0_i32 : i32, i32
  }
  func.func @transform_1(%arg0: i32) -> (i32, i32) {
    %c0_i32 = arith.constant 0 : i32
    %c0_i32_0 = arith.constant 0 : i32
    %c0_i32_1 = arith.constant 0 : i32
    return %c0_i32, %c0_i32_0 : i32, i32
  }
  func.func @transform_2(%arg0: i32) -> (i32, i32) {
    %c0_i32 = arith.constant 0 : i32
    %c0_i32_0 = arith.constant 0 : i32
    %c0_i32_1 = arith.constant 0 : i32
    return %c0_i32, %c0_i32_0 : i32, i32
  }
  func.func @transform_3(%arg0: i32) -> (i32, i32) {
    %c0_i32 = arith.constant 0 : i32
    %c0_i32_0 = arith.constant 0 : i32
    %c0_i32_1 = arith.constant 0 : i32
    return %c0_i32, %c0_i32_0 : i32, i32
  }
  func.func @transform_4(%arg0: i32) -> (i32, i32) {
    %c0_i32 = arith.constant 0 : i32
    %c0_i32_0 = arith.constant 0 : i32
    %c0_i32_1 = arith.constant 0 : i32
    return %c0_i32, %c0_i32_0 : i32, i32
  }
  func.func @transform_5(%arg0: i32) -> (i32, i32) {
    %c0_i32 = arith.constant 0 : i32
    %c0_i32_0 = arith.constant 0 : i32
    return %arg0, %c0_i32 : i32, i32
  }
}

module attributes {stable_mosaic.version = 11 : i64} {
  func.func @_mlp_kernel(%arg0: i32, %arg1: memref<128x256xf32, #tpu.memory_space<vmem>>, %arg2: memref<256x128xbf16, #tpu.memory_space<vmem>>, %arg3: memref<1x128xf32, #tpu.memory_space<vmem>>, %arg4: memref<128x128xbf16, #tpu.memory_space<vmem>>, %arg5: memref<1x128xf32, #tpu.memory_space<vmem>>, %arg6: memref<128x128xbf16, #tpu.memory_space<vmem>>) attributes {dimension_semantics = [#tpu.dimension_semantics<parallel>], iteration_bounds = array<i64: 2>, scalar_prefetch = 0 : i64, scratch_operands = 0 : i64, tpu.core_type = #tpu.core_type<tc>, window_params = [{transform_indices = @transform_0, window_bounds = array<i64: 128, 256>}, {pipeline_mode = #tpu.pipeline_mode<synchronous>, transform_indices = @transform_1, window_bounds = array<i64: 256, 128>}, {pipeline_mode = #tpu.pipeline_mode<synchronous>, transform_indices = @transform_2, window_bounds = array<i64: 1, 128>}, {pipeline_mode = #tpu.pipeline_mode<synchronous>, transform_indices = @transform_3, window_bounds = array<i64: 128, 128>}, {pipeline_mode = #tpu.pipeline_mode<synchronous>, transform_indices = @transform_4, window_bounds = array<i64: 1, 128>}, {transform_indices = @transform_5, window_bounds = array<i64: 128, 128>}]} {
    %c0 = arith.constant 0 : index
    %c0_0 = arith.constant 0 : index
    %0 = vector.load %arg1[%c0, %c0_0] : memref<128x256xf32, #tpu.memory_space<vmem>>, vector<128x256xf32>
    %1 = arith.truncf %0 : vector<128x256xf32> to vector<128x256xbf16>
    %c0_1 = arith.constant 0 : index
    %c0_2 = arith.constant 0 : index
    %2 = vector.load %arg2[%c0_1, %c0_2] : memref<256x128xbf16, #tpu.memory_space<vmem>>, vector<256x128xbf16>
    %cst = arith.constant dense<0.000000e+00> : vector<128x128xf32>
    %3 = tpu.matmul %1, %2, %cst {dimension_numbers = #tpu.dot_dimension_numbers<[1], [0], [0], [1], [0, 0, 1, 1], [], []>} : vector<128x256xbf16>, vector<256x128xbf16>, vector<128x128xf32> -> vector<128x128xf32>
    %c0_3 = arith.constant 0 : index
    %c0_4 = arith.constant 0 : index
    %4 = vector.load %arg3[%c0_3, %c0_4] : memref<1x128xf32, #tpu.memory_space<vmem>>, vector<1x128xf32>
    %5 = vector.broadcast %4 : vector<1x128xf32> to vector<128x128xf32>
    %6 = arith.addf %3, %5 : vector<128x128xf32>
    %cst_5 = arith.constant 0.000000e+00 : f32
    %7 = vector.broadcast %cst_5 : f32 to vector<128x128xf32>
    %8 = arith.maximumf %6, %7 : vector<128x128xf32>
    %9 = arith.truncf %8 : vector<128x128xf32> to vector<128x128xbf16>
    %c0_6 = arith.constant 0 : index
    %c0_7 = arith.constant 0 : index
    %10 = vector.load %arg4[%c0_6, %c0_7] : memref<128x128xbf16, #tpu.memory_space<vmem>>, vector<128x128xbf16>
    %cst_8 = arith.constant dense<0.000000e+00> : vector<128x128xf32>
    %11 = tpu.matmul %9, %10, %cst_8 {dimension_numbers = #tpu.dot_dimension_numbers<[1], [0], [0], [1], [0, 0, 1, 1], [], []>} : vector<128x128xbf16>, vector<128x128xbf16>, vector<128x128xf32> -> vector<128x128xf32>
    %c0_9 = arith.constant 0 : index
    %c0_10 = arith.constant 0 : index
    %12 = vector.load %arg5[%c0_9, %c0_10] : memref<1x128xf32, #tpu.memory_space<vmem>>, vector<1x128xf32>
    %13 = vector.broadcast %12 : vector<1x128xf32> to vector<128x128xf32>
    %14 = arith.addf %11, %13 : vector<128x128xf32>
    %15 = arith.truncf %14 : vector<128x128xf32> to vector<128x128xbf16>
    %c0_11 = arith.constant 0 : index
    %c0_12 = arith.constant 0 : index
    %16 = vector.load %arg6[%c0_11, %c0_12] : memref<128x128xbf16, #tpu.memory_space<vmem>>, vector<128x128xbf16>
    tpu.vector_store %arg6[%c0_11, %c0_12], %15 {strides = array<i32>} : memref<128x128xbf16, #tpu.memory_space<vmem>>, vector<128x128xbf16>,
    return
  }
  func.func @transform_0(%arg0: i32) -> (i32, i32) {
    %c0_i32 = arith.constant 0 : i32
    %c0_i32_0 = arith.constant 0 : i32
    return %arg0, %c0_i32 : i32, i32
  }
  func.func @transform_1(%arg0: i32) -> (i32, i32) {
    %c0_i32 = arith.constant 0 : i32
    %c0_i32_0 = arith.constant 0 : i32
    %c0_i32_1 = arith.constant 0 : i32
    return %c0_i32, %c0_i32_0 : i32, i32
  }
  func.func @transform_2(%arg0: i32) -> (i32, i32) {
    %c0_i32 = arith.constant 0 : i32
    %c0_i32_0 = arith.constant 0 : i32
    %c0_i32_1 = arith.constant 0 : i32
    return %c0_i32, %c0_i32_0 : i32, i32
  }
  func.func @transform_3(%arg0: i32) -> (i32, i32) {
    %c0_i32 = arith.constant 0 : i32
    %c0_i32_0 = arith.constant 0 : i32
    %c0_i32_1 = arith.constant 0 : i32
    return %c0_i32, %c0_i32_0 : i32, i32
  }
  func.func @transform_4(%arg0: i32) -> (i32, i32) {
    %c0_i32 = arith.constant 0 : i32
    %c0_i32_0 = arith.constant 0 : i32
    %c0_i32_1 = arith.constant 0 : i32
    return %c0_i32, %c0_i32_0 : i32, i32
  }
  func.func @transform_5(%arg0: i32) -> (i32, i32) {
    %c0_i32 = arith.constant 0 : i32
    %c0_i32_0 = arith.constant 0 : i32
    return %arg0, %c0_i32 : i32, i32
  }
}

</mosaic_0001>

<llo_original>
// kernel: tpu_custom_call.1
$region0: #{tpu_custom_call.1}
  #allocation0 [shape = 'u32[]', space=smem, size = 0x4, offset = 0x4, fixed_abs, tag = 'smem constant byte address 0x4 - core index']
  #allocation1 [shape = 'u32[72,128]{1,0:T(1,128)}', space=vmem, size = 0x9000, scoped, tag = 'internal scratch']
  %s0 = inlined_call_operand.hbm [shape: f32[256,256], index: 0, kind: input, shape index: {}]
  %s1 = inlined_call_operand.hbm [shape: bf16[256,128], index: 1, kind: input, shape index: {}]
  %s2 = inlined_call_operand.vmem [shape: f32[1,128], index: 2, kind: input, shape index: {}]
  %s3 = inlined_call_operand.hbm [shape: bf16[128,128], index: 3, kind: input, shape index: {}]
  %s4 = inlined_call_operand.vmem [shape: f32[1,128], index: 4, kind: input, shape index: {}]
  %s5 = inlined_call_operand.hbm [shape: bf16[256,128], index: 5, kind: output, shape index: {}]
  %s6 = sld [smem:[#allocation0]]
  $region65: #{tpu_custom_call.1} parent=0
    _
  %s8 = ssub.s32 1, %s6
  %s9 = scalar_select 0, %s8, %s6
  $region1: #{tpu_custom_call.1} parent=0
    #allocation2 [shape = 'u8[262144]{0}', space=vmem, size = 0x40000, scoped, tag = 'input window, operand 0']
    #allocation3 [shape = 's32[2]{0}', space=sflag, size = 0x8, scoped, tag = 'scoped memory for tpu_custom_call.1']
    #allocation4 [shape = 's32[2]{0}', space=sflag, size = 0x8, scoped, tag = 'scoped memory for tpu_custom_call.1']
    #allocation5 [shape = 'u8[65536]{0}', space=vmem, size = 0x10000, scoped, tag = 'input window, operand 1, single buffered']
    #allocation6 [shape = 's32[1]{0}', space=sflag, size = 0x4, scoped, tag = 'scoped memory for tpu_custom_call.1']
    #allocation7 [shape = 'u8[32768]{0}', space=vmem, size = 0x8000, scoped, tag = 'input window, operand 3, single buffered']
    #allocation8 [shape = 'u8[65536]{0}', space=vmem, size = 0x10000, scoped, tag = 'output window, operand 0']
    %10 = vsyncpa [#allocation3], 0
    %s11 = scalar_lea.sflag [#allocation3], 1
    %12 = vsyncpa %s11, 0
    %13 = vsyncpa [#allocation6], 0
    %14 = vsyncpa [#allocation4], 0
    %s15 = scalar_lea.sflag [#allocation4], 1
    %16 = vsyncpa %s15, 0
    loop: start=0, step=1, limit=4
    $region2: #{tpu_custom_call.1} parent=1 // loop_pre_header
      _
    $region3: #{tpu_custom_call.1} parent=1 // loop_header
      %s18 = sphi 0, %s22
      %p19 = scmp.ge.s32.totalorder %s18, 4
      %s28 = sphi 0, %s30
      %s31 = sphi 0, %s28
      %s32 = sphi 0, %s31
      %s48 = sphi 0, %s32
      %s52 = sphi 0, %s52
      %s54 = sphi 0, %s52
      %s55 = sphi 0, %s54
      %s69 = sphi 0, %s55
      %s73 = sphi 0, %s73
      %s75 = sphi 0, %s73
      %s76 = sphi 0, %s75
      %s90 = sphi 0, %s76
      %s94 = sphi 0, %s94
      %s96 = sphi 0, %s94
      %s97 = sphi 0, %s96
      %s111 = sphi 0, %s97
      %s115 = sphi 0, %s115
      %s117 = sphi 0, %s115
      %s118 = sphi 0, %s117
      %s132 = sphi 0, %s118
      %s138 = sphi 0, %s140
      %s141 = sphi 0, %s138
      %s142 = sphi 0, %s141
      %s158 = sphi 0, %s142
    $region4: #{tpu_custom_call.1} parent=1 // loop_header_branch
      %21 = sbr.rel (%p19) target = $region8
    $region5: #{tpu_custom_call.1} parent=1 // loop_body
      %s23 = ssub.s32 %s18, 1
      %s24 = ssub.s32 %s18, 2
      %s25 = sadd.s32 %s18, 1
      %s26 = ssub.s32 %s18, %s25
      %p27 = scmp.eq.s32.totalorder %s26, 0
      %s29 = sadd.s32 %s28, 1
      %s30 = scalar_select %p27, %s28, %s29
      %p33 = pneg %p27
      %p34 = scmp.eq.s32.totalorder %s18, 1
      %p35 = por %p33, %p34
      %p36 = scmp.ne.s32.totalorder %s28, %s31
      %p37 = scmp.eq.s32.totalorder %s18, 0
      %p38 = por %p36, %p37
      %p39 = scmp.ne.s32.totalorder %s28, %s31
      %p40 = scmp.eq.s32.totalorder %s23, 1
      %p41 = por %p39, %p40
      %p42 = scmp.ne.s32.totalorder %s31, %s32
      %p43 = scmp.eq.s32.totalorder %s23, 0
      %p44 = por %p42, %p43
      %p45 = scmp.ne.s32.totalorder %s31, %s32
      %p46 = scmp.eq.s32.totalorder %s24, 1
      %p47 = por %p45, %p46
      %p49 = scmp.ne.s32.totalorder %s32, %s48
      %p50 = scmp.eq.s32.totalorder %s24, 0
      %p51 = por %p49, %p50
      %s53 = sadd.s32 %s52, 1
      %p56 = scmp.eq.s32.totalorder %s18, 1
      %p57 = scmp.ne.s32.totalorder %s52, %s54
      %p58 = scmp.eq.s32.totalorder %s18, 0
      %p59 = por %p57, %p58
      %p60 = scmp.ne.s32.totalorder %s52, %s54
      %p61 = scmp.eq.s32.totalorder %s23, 1
      %p62 = por %p60, %p61
      %p63 = scmp.ne.s32.totalorder %s54, %s55
      %p64 = scmp.eq.s32.totalorder %s23, 0
      %p65 = por %p63, %p64
      %p66 = scmp.ne.s32.totalorder %s54, %s55
      %p67 = scmp.eq.s32.totalorder %s24, 1
      %p68 = por %p66, %p67
      %p70 = scmp.ne.s32.totalorder %s55, %s69
      %p71 = scmp.eq.s32.totalorder %s24, 0
      %p72 = por %p70, %p71
      %s74 = sadd.s32 %s73, 1
      %p77 = scmp.eq.s32.totalorder %s18, 1
      %p78 = scmp.ne.s32.totalorder %s73, %s75
      %p79 = scmp.eq.s32.totalorder %s18, 0
      %p80 = por %p78, %p79
      %p81 = scmp.ne.s32.totalorder %s73, %s75
      %p82 = scmp.eq.s32.totalorder %s23, 1
      %p83 = por %p81, %p82
      %p84 = scmp.ne.s32.totalorder %s75, %s76
      %p85 = scmp.eq.s32.totalorder %s23, 0
      %p86 = por %p84, %p85
      %p87 = scmp.ne.s32.totalorder %s75, %s76
      %p88 = scmp.eq.s32.totalorder %s24, 1
      %p89 = por %p87, %p88
      %p91 = scmp.ne.s32.totalorder %s76, %s90
      %p92 = scmp.eq.s32.totalorder %s24, 0
      %p93 = por %p91, %p92
      %s95 = sadd.s32 %s94, 1
      %p98 = scmp.eq.s32.totalorder %s18, 1
      %p99 = scmp.ne.s32.totalorder %s94, %s96
      %p100 = scmp.eq.s32.totalorder %s18, 0
      %p101 = por %p99, %p100
      %p102 = scmp.ne.s32.totalorder %s94, %s96
      %p103 = scmp.eq.s32.totalorder %s23, 1
      %p104 = por %p102, %p103
      %p105 = scmp.ne.s32.totalorder %s96, %s97
      %p106 = scmp.eq.s32.totalorder %s23, 0
      %p107 = por %p105, %p106
      %p108 = scmp.ne.s32.totalorder %s96, %s97
      %p109 = scmp.eq.s32.totalorder %s24, 1
      %p110 = por %p108, %p109
      %p112 = scmp.ne.s32.totalorder %s97, %s111
      %p113 = scmp.eq.s32.totalorder %s24, 0
      %p114 = por %p112, %p113
      %s116 = sadd.s32 %s115, 1
      %p119 = scmp.eq.s32.totalorder %s18, 1
      %p120 = scmp.ne.s32.totalorder %s115, %s117
      %p121 = scmp.eq.s32.totalorder %s18, 0
      %p122 = por %p120, %p121
      %p123 = scmp.ne.s32.totalorder %s115, %s117
      %p124 = scmp.eq.s32.totalorder %s23, 1
      %p125 = por %p123, %p124
      %p126 = scmp.ne.s32.totalorder %s117, %s118
      %p127 = scmp.eq.s32.totalorder %s23, 0
      %p128 = por %p126, %p127
      %p129 = scmp.ne.s32.totalorder %s117, %s118
      %p130 = scmp.eq.s32.totalorder %s24, 1
      %p131 = por %p129, %p130
      %p133 = scmp.ne.s32.totalorder %s118, %s132
      %p134 = scmp.eq.s32.totalorder %s24, 0
      %p135 = por %p133, %p134
      %s136 = ssub.s32 %s18, %s25
      %p137 = scmp.eq.s32.totalorder %s136, 0
      %s139 = sadd.s32 %s138, 1
      %s140 = scalar_select %p137, %s138, %s139
      %p143 = pneg %p137
      %p144 = scmp.eq.s32.totalorder %s18, 1
      %p145 = por %p143, %p144
      %p146 = scmp.ne.s32.totalorder %s138, %s141
      %p147 = scmp.eq.s32.totalorder %s18, 0
      %p148 = por %p146, %p147
      %p149 = scmp.ne.s32.totalorder %s138, %s141
      %p150 = scmp.eq.s32.totalorder %s23, 1
      %p151 = por %p149, %p150
      %p152 = scmp.ne.s32.totalorder %s141, %s142
      %p153 = scmp.eq.s32.totalorder %s23, 0
      %p154 = por %p152, %p153
      %p155 = scmp.ne.s32.totalorder %s141, %s142
      %p156 = scmp.eq.s32.totalorder %s24, 1
      %p157 = por %p155, %p156
      %p159 = scmp.ne.s32.totalorder %s142, %s158
      %p160 = scmp.eq.s32.totalorder %s24, 0
      %p161 = por %p159, %p160
      %p162 = scmp.le.s32.totalorder 1, %s18
      %p163 = scmp.lt.s32.totalorder %s18, 3
      %p164 = pnand %p162, %p163
      %p165 = pneg %p164
      // Predicated region
      $region9: #{tpu_custom_call.1} parent=5 // pred_check
        _
      $region10: #{tpu_custom_call.1} parent=5 // pred_check_branch
        %167 = sbr.rel (%p164) target = $region12
      $region11: #{tpu_custom_call.1} parent=5 // pred_region
        %s168 = ssub.s32 %s18, 1
        // Predicated region
        $region13: #{tpu_custom_call.1} parent=11 // pred_check
          %p169 = pneg %p65
        $region14: #{tpu_custom_call.1} parent=11 // pred_check_branch
          %171 = sbr.rel (%p169) target = $region16
        $region15: #{tpu_custom_call.1} parent=11 // pred_region
          %173 = vsyncadd [#allocation6], 0
          %s174 = sshll.u32 %s1, 4
          %s175 = int_to_ptr.hbm [resolvable:$true] %s174
          %s176 = sshll.u32 [#allocation5], 4
          %s177 = int_to_ptr.vmem [resolvable:$true] %s176
          %182 = dma.hbm_to_vmem [thread:$0]  %s175, 2048, %s177, [#allocation6], 64, 64, 4
        $region16: #{tpu_custom_call.1} parent=11 // pred_fallthru
          _
        // Predicated region
        $region17: #{tpu_custom_call.1} parent=11 // pred_check
          %p183 = pneg %p86
        $region18: #{tpu_custom_call.1} parent=11 // pred_check_branch
          %185 = sbr.rel (%p183) target = $region20
        $region19: #{tpu_custom_call.1} parent=11 // pred_region
          _
        $region20: #{tpu_custom_call.1} parent=11 // pred_fallthru
          _
        // Predicated region
        $region21: #{tpu_custom_call.1} parent=11 // pred_check
          %p186 = pneg %p107
        $region22: #{tpu_custom_call.1} parent=11 // pred_check_branch
          %188 = sbr.rel (%p186) target = $region24
        $region23: #{tpu_custom_call.1} parent=11 // pred_region
          %190 = vsyncadd [#allocation6], 0
          %s191 = sshll.u32 %s3, 4
          %s192 = int_to_ptr.hbm [resolvable:$true] %s191
          %s193 = sshll.u32 [#allocation7], 4
          %s194 = int_to_ptr.vmem [resolvable:$true] %s193
          %199 = dma.hbm_to_vmem [thread:$0]  %s192, 1024, %s194, [#allocation6], 64, 64, 4
        $region24: #{tpu_custom_call.1} parent=11 // pred_fallthru
          _
        // Predicated region
        $region25: #{tpu_custom_call.1} parent=11 // pred_check
          %p200 = pneg %p128
        $region26: #{tpu_custom_call.1} parent=11 // pred_check_branch
          %202 = sbr.rel (%p200) target = $region28
        $region27: #{tpu_custom_call.1} parent=11 // pred_region
          _
        $region28: #{tpu_custom_call.1} parent=11 // pred_fallthru
          _
      $region12: #{tpu_custom_call.1} parent=5 // pred_fallthru
        _
      %p203 = scmp.lt.s32.totalorder %s18, 2
      // Predicated region
      $region29: #{tpu_custom_call.1} parent=5 // pred_check
        %p204 = pneg %p203
      $region30: #{tpu_custom_call.1} parent=5 // pred_check_branch
        %206 = sbr.rel (%p204) target = $region32
      $region31: #{tpu_custom_call.1} parent=5 // pred_region
        // Predicated region
        $region33: #{tpu_custom_call.1} parent=31 // pred_check
          %p207 = pneg %p38
        $region34: #{tpu_custom_call.1} parent=31 // pred_check_branch
          %209 = sbr.rel (%p207) target = $region36
        $region35: #{tpu_custom_call.1} parent=31 // pred_region
          %s210 = sand.u32 %s28, 1
          %s211 = scalar_lea.sflag [#allocation3], %s210
          %s212 = sand.u32 %s28, 1
          %s213 = smul.addr %s212, 256
          %s214 = scalar_lea.vmem [#allocation2], %s213
          %s215 = smul.u32 16, %s18
          %217 = vsyncadd %s211, 0
          %s218 = smul.addr %s215, 2
          %s219 = smul.addr %s218, 8
          %s220 = scalar_lea.hbm %s0, %s219
          %s221 = sshll.u32 %s220, 4
          %s222 = int_to_ptr.hbm [resolvable:$true] %s221
          %s223 = sshll.u32 %s214, 4
          %s224 = int_to_ptr.vmem [resolvable:$true] %s223
          %229 = dma.hbm_to_vmem [thread:$0]  %s222, 4096, %s224, %s211, 256, 256, 16
        $region36: #{tpu_custom_call.1} parent=31 // pred_fallthru
          _
      $region32: #{tpu_custom_call.1} parent=5 // pred_fallthru
        _
      %p230 = scmp.le.s32.totalorder 1, %s18
      %p231 = scmp.lt.s32.totalorder %s18, 3
      %p232 = pnand %p230, %p231
      %p233 = pneg %p232
      // Predicated region
      $region37: #{tpu_custom_call.1} parent=5 // pred_check
        _
      $region38: #{tpu_custom_call.1} parent=5 // pred_check_branch
        %235 = sbr.rel (%p232) target = $region40
      $region39: #{tpu_custom_call.1} parent=5 // pred_region
        %s236 = ssub.s32 %s18, 1
        %s237 = sand.u32 %s31, 1
        %s238 = scalar_lea.sflag [#allocation3], %s237
        %s239 = sand.u32 %s31, 1
        %s240 = smul.addr %s239, 256
        %s241 = scalar_lea.vmem [#allocation2], %s240
        // Predicated region
        $region41: #{tpu_custom_call.1} parent=39 // pred_check
          %p242 = pneg %p44
        $region42: #{tpu_custom_call.1} parent=39 // pred_check_branch
          %244 = sbr.rel (%p242) target = $region44
        $region43: #{tpu_custom_call.1} parent=39 // pred_region
          %246 = dma.done %s238, 4096
        $region44: #{tpu_custom_call.1} parent=39 // pred_fallthru
          _
        // Predicated region
        $region45: #{tpu_custom_call.1} parent=39 // pred_check
          %p247 = pneg %p65
        $region46: #{tpu_custom_call.1} parent=39 // pred_check_branch
          %249 = sbr.rel (%p247) target = $region48
        $region47: #{tpu_custom_call.1} parent=39 // pred_region
          %251 = dma.done [#allocation6], 2048
        $region48: #{tpu_custom_call.1} parent=39 // pred_fallthru
          _
        // Predicated region
        $region49: #{tpu_custom_call.1} parent=39 // pred_check
          %p252 = pneg %p107
        $region50: #{tpu_custom_call.1} parent=39 // pred_check_branch
          %254 = sbr.rel (%p252) target = $region52
        $region51: #{tpu_custom_call.1} parent=39 // pred_region
          %256 = dma.done [#allocation6], 1024
        $region52: #{tpu_custom_call.1} parent=39 // pred_fallthru
          _
        %s257 = sand.u32 %s31, 1
        %s258 = scalar_lea.sflag [#allocation3], %s257
        %s259 = sand.u32 %s31, 1
        %s260 = smul.addr %s259, 256
        %s261 = scalar_lea.vmem [#allocation2], %s260
        %p262 = pneg %p44
        %p263 = pneg %p41
        %p264 = pneg %p65
        %p265 = pneg %p62
        %p266 = pneg %p86
        %p267 = pneg %p83
        %p268 = pneg %p107
        %p269 = pneg %p104
        %p270 = pneg %p128
        %p271 = pneg %p125
        %p272 = pneg %p154
        %p273 = pneg %p151
        %s274 = sand.u32 %s141, 1
        %s275 = scalar_lea.sflag [#allocation4], %s274
        %s276 = sand.u32 %s141, 1
        %s277 = smul.addr %s276, 64
        %s278 = scalar_lea.vmem [#allocation8], %s277
        %s279 = smul.u32 16, %s23
        %s280 = smul.u32 16, %s23
        %v281 = vld [vmem:[%s241] sm:$0xff]
        %v282 = vld [vmem:[%s241 + $0x8] sm:$0xff]
        %v283 = vld [vmem:[%s241 + $0x10] sm:$0xff]
        %v284 = vld [vmem:[%s241 + $0x18] sm:$0xff]
        %v285 = vld [vmem:[%s241 + $0x20] sm:$0xff]
        %v286 = vld [vmem:[%s241 + $0x28] sm:$0xff]
        %v287 = vld [vmem:[%s241 + $0x30] sm:$0xff]
        %v288 = vld [vmem:[%s241 + $0x38] sm:$0xff]
        %v289 = vld [vmem:[%s241 + $0x40] sm:$0xff]
        %v290 = vld [vmem:[%s241 + $0x48] sm:$0xff]
        %v291 = vld [vmem:[%s241 + $0x50] sm:$0xff]
        %v292 = vld [vmem:[%s241 + $0x58] sm:$0xff]
        %v293 = vld [vmem:[%s241 + $0x60] sm:$0xff]
        %v294 = vld [vmem:[%s241 + $0x68] sm:$0xff]
        %v295 = vld [vmem:[%s241 + $0x70] sm:$0xff]
        %v296 = vld [vmem:[%s241 + $0x78] sm:$0xff]
        %v297 = vld [vmem:[%s241 + $0x80] sm:$0xff]
        %v298 = vld [vmem:[%s241 + $0x88] sm:$0xff]
        %v299 = vld [vmem:[%s241 + $0x90] sm:$0xff]
        %v300 = vld [vmem:[%s241 + $0x98] sm:$0xff]
        %v301 = vld [vmem:[%s241 + $0xa0] sm:$0xff]
        %v302 = vld [vmem:[%s241 + $0xa8] sm:$0xff]
        %v303 = vld [vmem:[%s241 + $0xb0] sm:$0xff]
        %v304 = vld [vmem:[%s241 + $0xb8] sm:$0xff]
        %v305 = vld [vmem:[%s241 + $0xc0] sm:$0xff]
        %v306 = vld [vmem:[%s241 + $0xc8] sm:$0xff]
        %v307 = vld [vmem:[%s241 + $0xd0] sm:$0xff]
        %v308 = vld [vmem:[%s241 + $0xd8] sm:$0xff]
        %v309 = vld [vmem:[%s241 + $0xe0] sm:$0xff]
        %v310 = vld [vmem:[%s241 + $0xe8] sm:$0xff]
        %v311 = vld [vmem:[%s241 + $0xf0] sm:$0xff]
        %v312 = vld [vmem:[%s241 + $0xf8] sm:$0xff]
        %v313 = vpack.c.bf16 %v283, %v281
        %v314 = vpack.c.bf16 %v284, %v282
        %v315 = vpack.c.bf16 %v287, %v285
        %v316 = vpack.c.bf16 %v288, %v286
        %v317 = vpack.c.bf16 %v291, %v289
        %v318 = vpack.c.bf16 %v292, %v290
        %v319 = vpack.c.bf16 %v295, %v293
        %v320 = vpack.c.bf16 %v296, %v294
        %v321 = vpack.c.bf16 %v299, %v297
        %v322 = vpack.c.bf16 %v300, %v298
        %v323 = vpack.c.bf16 %v303, %v301
        %v324 = vpack.c.bf16 %v304, %v302
        %v325 = vpack.c.bf16 %v307, %v305
        %v326 = vpack.c.bf16 %v308, %v306
        %v327 = vpack.c.bf16 %v311, %v309
        %v328 = vpack.c.bf16 %v312, %v310
        %v329 = vld [vmem:[#allocation5] sm:$0xf]
        %v330 = vld [vmem:[#allocation5 + $0x4] sm:$0xf]
        %v331 = vld [vmem:[#allocation5 + $0x8] sm:$0xf]
        %v332 = vld [vmem:[#allocation5 + $0xc] sm:$0xf]
        %v333 = vld [vmem:[#allocation5 + $0x10] sm:$0xf]
        %v334 = vld [vmem:[#allocation5 + $0x14] sm:$0xf]
        %v335 = vld [vmem:[#allocation5 + $0x18] sm:$0xf]
        %v336 = vld [vmem:[#allocation5 + $0x1c] sm:$0xf]
        %v337 = vld [vmem:[#allocation5 + $0x20] sm:$0xf]
        %v338 = vld [vmem:[#allocation5 + $0x24] sm:$0xf]
        %v339 = vld [vmem:[#allocation5 + $0x28] sm:$0xf]
        %v340 = vld [vmem:[#allocation5 + $0x2c] sm:$0xf]
        %v341 = vld [vmem:[#allocation5 + $0x30] sm:$0xf]
        %v342 = vld [vmem:[#allocation5 + $0x34] sm:$0xf]
        %v343 = vld [vmem:[#allocation5 + $0x38] sm:$0xf]
        %v344 = vld [vmem:[#allocation5 + $0x3c] sm:$0xf]
        %v345 = vld [vmem:[#allocation5 + $0x40] sm:$0xf]
        %v346 = vld [vmem:[#allocation5 + $0x44] sm:$0xf]
        %v347 = vld [vmem:[#allocation5 + $0x48] sm:$0xf]
        %v348 = vld [vmem:[#allocation5 + $0x4c] sm:$0xf]
        %v349 = vld [vmem:[#allocation5 + $0x50] sm:$0xf]
        %v350 = vld [vmem:[#allocation5 + $0x54] sm:$0xf]
        %v351 = vld [vmem:[#allocation5 + $0x58] sm:$0xf]
        %v352 = vld [vmem:[#allocation5 + $0x5c] sm:$0xf]
        %v353 = vld [vmem:[#allocation5 + $0x60] sm:$0xf]
        %v354 = vld [vmem:[#allocation5 + $0x64] sm:$0xf]
        %v355 = vld [vmem:[#allocation5 + $0x68] sm:$0xf]
        %v356 = vld [vmem:[#allocation5 + $0x6c] sm:$0xf]
        %v357 = vld [vmem:[#allocation5 + $0x70] sm:$0xf]
        %v358 = vld [vmem:[#allocation5 + $0x74] sm:$0xf]
        %v359 = vld [vmem:[#allocation5 + $0x78] sm:$0xf]
        %v360 = vld [vmem:[#allocation5 + $0x7c] sm:$0xf]
        %v361 = vld [vmem:[%s2] sm:$0x1]
        %v363 = vperm.slane %v361, 0
        %v397 = vunpack.c.l.b16 %v329
        %v398 = vunpack.c.l.b16 %v330
        %v399 = vunpack.c.l.b16 %v331
        %v400 = vunpack.c.l.b16 %v332
        %v401 = vunpack.c.l.b16 %v333
        %v402 = vunpack.c.l.b16 %v334
        %v403 = vunpack.c.l.b16 %v335
        %v404 = vunpack.c.l.b16 %v336
        %v405 = vunpack.c.l.b16 %v337
        %v406 = vunpack.c.l.b16 %v338
        %v407 = vunpack.c.l.b16 %v339
        %v408 = vunpack.c.l.b16 %v340
        %v409 = vunpack.c.l.b16 %v341
        %v410 = vunpack.c.l.b16 %v342
        %v411 = vunpack.c.l.b16 %v343
        %v412 = vunpack.c.l.b16 %v344
        %v413 = vunpack.c.l.b16 %v345
        %v414 = vunpack.c.l.b16 %v346
        %v415 = vunpack.c.l.b16 %v347
        %v416 = vunpack.c.l.b16 %v348
        %v417 = vunpack.c.l.b16 %v349
        %v418 = vunpack.c.l.b16 %v350
        %v419 = vunpack.c.l.b16 %v351
        %v420 = vunpack.c.l.b16 %v352
        %v421 = vunpack.c.l.b16 %v353
        %v422 = vunpack.c.l.b16 %v354
        %v423 = vunpack.c.l.b16 %v355
        %v424 = vunpack.c.l.b16 %v356
        %v425 = vunpack.c.l.b16 %v357
        %v426 = vunpack.c.l.b16 %v358
        %v427 = vunpack.c.l.b16 %v359
        %v428 = vunpack.c.l.b16 %v360
        %v429 = vpack.c.b16 %v398, %v397
        %v430 = vpack.c.b16 %v400, %v399
        %v431 = vpack.c.b16 %v402, %v401
        %v432 = vpack.c.b16 %v404, %v403
        %v433 = vpack.c.b16 %v406, %v405
        %v434 = vpack.c.b16 %v408, %v407
        %v435 = vpack.c.b16 %v410, %v409
        %v436 = vpack.c.b16 %v412, %v411
        %v437 = vpack.c.b16 %v414, %v413
        %v438 = vpack.c.b16 %v416, %v415
        %v439 = vpack.c.b16 %v418, %v417
        %v440 = vpack.c.b16 %v420, %v419
        %v441 = vpack.c.b16 %v422, %v421
        %v442 = vpack.c.b16 %v424, %v423
        %v443 = vpack.c.b16 %v426, %v425
        %v444 = vpack.c.b16 %v428, %v427
        %461 = vmatpush.bf16.msra.mxu0 %v436
        %462 = vmatpush.bf16.msra.mxu0 %v435
        %463 = vmatpush.bf16.msra.mxu0 %v434
        %464 = vmatpush.bf16.msra.mxu0 %v433
        %465 = vmatpush.bf16.msra.mxu0 %v432
        %466 = vmatpush.bf16.msra.mxu0 %v431
        %467 = vmatpush.bf16.msra.mxu0 %v430
        %468 = vmatpush.bf16.msra.mxu0 %v429
        %469 = vmatmul.bf16.gmra.mxu0 %v313
        %v470 = vpop.f32.mrf.mxu0
        %v471 = vadd.f32 %v363, %v470
        %v472 = vpop.f32.mrf.mxu0
        %v473 = vadd.f32 %v363, %v472
        %474 = vmatmul.bf16.gmra.mxu0 %v315
        %v475 = vpop.f32.mrf.mxu0
        %v476 = vadd.f32 %v363, %v475
        %v477 = vpop.f32.mrf.mxu0
        %v478 = vadd.f32 %v363, %v477
        %479 = vmatmul.bf16.gmra.mxu0 %v317
        %v480 = vpop.f32.mrf.mxu0
        %v481 = vadd.f32 %v363, %v480
        %v482 = vpop.f32.mrf.mxu0
        %v483 = vadd.f32 %v363, %v482
        %484 = vmatmul.bf16.gmra.mxu0 %v319
        %v485 = vpop.f32.mrf.mxu0
        %v486 = vadd.f32 %v363, %v485
        %v487 = vpop.f32.mrf.mxu0
        %v488 = vadd.f32 %v363, %v487
        %489 = vmatmul.bf16.gmra.mxu0 %v321
        %v490 = vpop.f32.mrf.mxu0
        %v491 = vadd.f32 %v363, %v490
        %v492 = vpop.f32.mrf.mxu0
        %v493 = vadd.f32 %v363, %v492
        %494 = vmatmul.bf16.gmra.mxu0 %v323
        %v495 = vpop.f32.mrf.mxu0
        %v496 = vadd.f32 %v363, %v495
        %v497 = vpop.f32.mrf.mxu0
        %v498 = vadd.f32 %v363, %v497
        %499 = vmatmul.bf16.gmra.mxu0 %v325
        %v500 = vpop.f32.mrf.mxu0
        %v501 = vadd.f32 %v363, %v500
        %v502 = vpop.f32.mrf.mxu0
        %v503 = vadd.f32 %v363, %v502
        %504 = vmatmul.bf16.gmra.mxu0 %v327
        %v505 = vpop.f32.mrf.mxu0
        %v506 = vadd.f32 %v363, %v505
        %v507 = vpop.f32.mrf.mxu0
        %v508 = vadd.f32 %v363, %v507
        %509 = vdwg.mxu0
        %510 = vmatpush.bf16.msra.mxu0 %v444
        %511 = vmatpush.bf16.msra.mxu0 %v443
        %512 = vmatpush.bf16.msra.mxu0 %v442
        %513 = vmatpush.bf16.msra.mxu0 %v441
        %514 = vmatpush.bf16.msra.mxu0 %v440
        %515 = vmatpush.bf16.msra.mxu0 %v439
        %516 = vmatpush.bf16.msra.mxu0 %v438
        %517 = vmatpush.bf16.msra.mxu0 %v437
        %518 = vmatmul.bf16.gmra.mxu0 %v314
        %v519 = vpop.f32.mrf.mxu0
        %v520 = vadd.f32 %v471, %v519
        %v521 = vpop.f32.mrf.mxu0
        %v522 = vadd.f32 %v473, %v521
        %523 = vmatmul.bf16.gmra.mxu0 %v316
        %v524 = vpop.f32.mrf.mxu0
        %v525 = vadd.f32 %v476, %v524
        %v526 = vpop.f32.mrf.mxu0
        %v527 = vadd.f32 %v478, %v526
        %528 = vmatmul.bf16.gmra.mxu0 %v318
        %v529 = vpop.f32.mrf.mxu0
        %v530 = vadd.f32 %v481, %v529
        %v531 = vpop.f32.mrf.mxu0
        %v532 = vadd.f32 %v483, %v531
        %533 = vmatmul.bf16.gmra.mxu0 %v320
        %v534 = vpop.f32.mrf.mxu0
        %v535 = vadd.f32 %v486, %v534
        %v536 = vpop.f32.mrf.mxu0
        %v537 = vadd.f32 %v488, %v536
        %538 = vmatmul.bf16.gmra.mxu0 %v322
        %v539 = vpop.f32.mrf.mxu0
        %v540 = vadd.f32 %v491, %v539
        %v541 = vpop.f32.mrf.mxu0
        %v542 = vadd.f32 %v493, %v541
        %543 = vmatmul.bf16.gmra.mxu0 %v324
        %v544 = vpop.f32.mrf.mxu0
        %v545 = vadd.f32 %v496, %v544
        %v546 = vpop.f32.mrf.mxu0
        %v547 = vadd.f32 %v498, %v546
        %548 = vmatmul.bf16.gmra.mxu0 %v326
        %v549 = vpop.f32.mrf.mxu0
        %v550 = vadd.f32 %v501, %v549
        %v551 = vpop.f32.mrf.mxu0
        %v552 = vadd.f32 %v503, %v551
        %553 = vmatmul.bf16.gmra.mxu0 %v328
        %v554 = vpop.f32.mrf.mxu0
        %v555 = vadd.f32 %v506, %v554
        %v556 = vpop.f32.mrf.mxu0
        %v557 = vadd.f32 %v508, %v556
        %558 = vdwg.mxu0
        %v559 = vmax.f32 %v520, 0.0
        %v560 = vmax.f32 %v522, 0.0
        %v561 = vmax.f32 %v525, 0.0
        %v562 = vmax.f32 %v527, 0.0
        %v563 = vmax.f32 %v530, 0.0
        %v564 = vmax.f32 %v532, 0.0
        %v565 = vmax.f32 %v535, 0.0
        %v566 = vmax.f32 %v537, 0.0
        %v567 = vmax.f32 %v540, 0.0
        %v568 = vmax.f32 %v542, 0.0
        %v569 = vmax.f32 %v545, 0.0
        %v570 = vmax.f32 %v547, 0.0
        %v571 = vmax.f32 %v550, 0.0
        %v572 = vmax.f32 %v552, 0.0
        %v573 = vmax.f32 %v555, 0.0
        %v574 = vmax.f32 %v557, 0.0
        %v575 = vpack.c.bf16 %v560, %v559
        %v576 = vpack.c.bf16 %v562, %v561
        %v577 = vpack.c.bf16 %v564, %v563
        %v578 = vpack.c.bf16 %v566, %v565
        %v579 = vpack.c.bf16 %v568, %v567
        %v580 = vpack.c.bf16 %v570, %v569
        %v581 = vpack.c.bf16 %v572, %v571
        %v582 = vpack.c.bf16 %v574, %v573
        %v583 = vld [vmem:[#allocation7] sm:$0xf]
        %v584 = vld [vmem:[#allocation7 + $0x4] sm:$0xf]
        %v585 = vld [vmem:[#allocation7 + $0x8] sm:$0xf]
        %v586 = vld [vmem:[#allocation7 + $0xc] sm:$0xf]
        %v587 = vld [vmem:[#allocation7 + $0x10] sm:$0xf]
        %v588 = vld [vmem:[#allocation7 + $0x14] sm:$0xf]
        %v589 = vld [vmem:[#allocation7 + $0x18] sm:$0xf]
        %v590 = vld [vmem:[#allocation7 + $0x1c] sm:$0xf]
        %v591 = vld [vmem:[#allocation7 + $0x20] sm:$0xf]
        %v592 = vld [vmem:[#allocation7 + $0x24] sm:$0xf]
        %v593 = vld [vmem:[#allocation7 + $0x28] sm:$0xf]
        %v594 = vld [vmem:[#allocation7 + $0x2c] sm:$0xf]
        %v595 = vld [vmem:[#allocation7 + $0x30] sm:$0xf]
        %v596 = vld [vmem:[#allocation7 + $0x34] sm:$0xf]
        %v597 = vld [vmem:[#allocation7 + $0x38] sm:$0xf]
        %v598 = vld [vmem:[#allocation7 + $0x3c] sm:$0xf]
        %v599 = vld [vmem:[%s4] sm:$0x1]
        %v601 = vperm.slane %v599, 0
        %v619 = vunpack.c.l.b16 %v583
        %v620 = vunpack.c.l.b16 %v584
        %v621 = vunpack.c.l.b16 %v585
        %v622 = vunpack.c.l.b16 %v586
        %v623 = vunpack.c.l.b16 %v587
        %v624 = vunpack.c.l.b16 %v588
        %v625 = vunpack.c.l.b16 %v589
        %v626 = vunpack.c.l.b16 %v590
        %v627 = vunpack.c.l.b16 %v591
        %v628 = vunpack.c.l.b16 %v592
        %v629 = vunpack.c.l.b16 %v593
        %v630 = vunpack.c.l.b16 %v594
        %v631 = vunpack.c.l.b16 %v595
        %v632 = vunpack.c.l.b16 %v596
        %v633 = vunpack.c.l.b16 %v597
        %v634 = vunpack.c.l.b16 %v598
        %v635 = vpack.c.b16 %v620, %v619
        %v636 = vpack.c.b16 %v622, %v621
        %v637 = vpack.c.b16 %v624, %v623
        %v638 = vpack.c.b16 %v626, %v625
        %v639 = vpack.c.b16 %v628, %v627
        %v640 = vpack.c.b16 %v630, %v629
        %v641 = vpack.c.b16 %v632, %v631
        %v642 = vpack.c.b16 %v634, %v633
        %651 = vmatpush.bf16.msra.mxu0 %v642
        %652 = vmatpush.bf16.msra.mxu0 %v641
        %653 = vmatpush.bf16.msra.mxu0 %v640
        %654 = vmatpush.bf16.msra.mxu0 %v639
        %655 = vmatpush.bf16.msra.mxu0 %v638
        %656 = vmatpush.bf16.msra.mxu0 %v637
        %657 = vmatpush.bf16.msra.mxu0 %v636
        %658 = vmatpush.bf16.msra.mxu0 %v635
        %659 = vmatmul.bf16.gmra.mxu0 %v575
        %v660 = vpop.f32.mrf.mxu0
        %v661 = vadd.f32 %v601, %v660
        %v662 = vpop.f32.mrf.mxu0
        %v663 = vadd.f32 %v601, %v662
        %664 = vmatmul.bf16.gmra.mxu0 %v576
        %v665 = vpop.f32.mrf.mxu0
        %v666 = vadd.f32 %v601, %v665
        %v667 = vpop.f32.mrf.mxu0
        %v668 = vadd.f32 %v601, %v667
        %669 = vmatmul.bf16.gmra.mxu0 %v577
        %v670 = vpop.f32.mrf.mxu0
        %v671 = vadd.f32 %v601, %v670
        %v672 = vpop.f32.mrf.mxu0
        %v673 = vadd.f32 %v601, %v672
        %674 = vmatmul.bf16.gmra.mxu0 %v578
        %v675 = vpop.f32.mrf.mxu0
        %v676 = vadd.f32 %v601, %v675
        %v677 = vpop.f32.mrf.mxu0
        %v678 = vadd.f32 %v601, %v677
        %679 = vmatmul.bf16.gmra.mxu0 %v579
        %v680 = vpop.f32.mrf.mxu0
        %v681 = vadd.f32 %v601, %v680
        %v682 = vpop.f32.mrf.mxu0
        %v683 = vadd.f32 %v601, %v682
        %684 = vmatmul.bf16.gmra.mxu0 %v580
        %v685 = vpop.f32.mrf.mxu0
        %v686 = vadd.f32 %v601, %v685
        %v687 = vpop.f32.mrf.mxu0
        %v688 = vadd.f32 %v601, %v687
        %689 = vmatmul.bf16.gmra.mxu0 %v581
        %v690 = vpop.f32.mrf.mxu0
        %v691 = vadd.f32 %v601, %v690
        %v692 = vpop.f32.mrf.mxu0
        %v693 = vadd.f32 %v601, %v692
        %694 = vmatmul.bf16.gmra.mxu0 %v582
        %v695 = vpop.f32.mrf.mxu0
        %v696 = vadd.f32 %v601, %v695
        %v697 = vpop.f32.mrf.mxu0
        %v698 = vadd.f32 %v601, %v697
        %699 = vdwg.mxu0
        %v700 = vpack.c.bf16 %v661, %v661
        %v701 = vpack.c.bf16 %v663, %v663
        %v702 = vpack.c.bf16 %v666, %v666
        %v703 = vpack.c.bf16 %v668, %v668
        %v704 = vpack.c.bf16 %v671, %v671
        %v705 = vpack.c.bf16 %v673, %v673
        %v706 = vpack.c.bf16 %v676, %v676
        %v707 = vpack.c.bf16 %v678, %v678
        %v708 = vpack.c.bf16 %v681, %v681
        %v709 = vpack.c.bf16 %v683, %v683
        %v710 = vpack.c.bf16 %v686, %v686
        %v711 = vpack.c.bf16 %v688, %v688
        %v712 = vpack.c.bf16 %v691, %v691
        %v713 = vpack.c.bf16 %v693, %v693
        %v714 = vpack.c.bf16 %v696, %v696
        %v715 = vpack.c.bf16 %v698, %v698
        %716 = vst [vmem:[%s278] sm:$0xf] %v700
        %717 = vst [vmem:[%s278 + $0x4] sm:$0xf] %v701
        %718 = vst [vmem:[%s278 + $0x8] sm:$0xf] %v702
        %719 = vst [vmem:[%s278 + $0xc] sm:$0xf] %v703
        %720 = vst [vmem:[%s278 + $0x10] sm:$0xf] %v704
        %721 = vst [vmem:[%s278 + $0x14] sm:$0xf] %v705
        %722 = vst [vmem:[%s278 + $0x18] sm:$0xf] %v706
        %723 = vst [vmem:[%s278 + $0x1c] sm:$0xf] %v707
        %724 = vst [vmem:[%s278 + $0x20] sm:$0xf] %v708
        %725 = vst [vmem:[%s278 + $0x24] sm:$0xf] %v709
        %726 = vst [vmem:[%s278 + $0x28] sm:$0xf] %v710
        %727 = vst [vmem:[%s278 + $0x2c] sm:$0xf] %v711
        %728 = vst [vmem:[%s278 + $0x30] sm:$0xf] %v712
        %729 = vst [vmem:[%s278 + $0x34] sm:$0xf] %v713
        %730 = vst [vmem:[%s278 + $0x38] sm:$0xf] %v714
        %731 = vst [vmem:[%s278 + $0x3c] sm:$0xf] %v715
        %s732 = sand.u32 %s141, 1
        %s733 = scalar_lea.sflag [#allocation4], %s732
        %s734 = sand.u32 %s141, 1
        %s735 = smul.addr %s734, 64
        %s736 = scalar_lea.vmem [#allocation8], %s735
        // Predicated region
        $region53: #{tpu_custom_call.1} parent=39 // pred_check
          %p737 = pneg %p151
        $region54: #{tpu_custom_call.1} parent=39 // pred_check_branch
          %739 = sbr.rel (%p737) target = $region56
        $region55: #{tpu_custom_call.1} parent=39 // pred_region
          %s740 = smul.u32 16, %s23
          %742 = vsyncadd %s733, 0
          %s743 = smul.addr %s740, 4
          %s744 = scalar_lea.hbm %s5, %s743
          %s745 = sshll.u32 %s736, 4
          %s746 = int_to_ptr.vmem [resolvable:$true] %s745
          %s747 = sshll.u32 %s744, 4
          %s748 = int_to_ptr.hbm [resolvable:$true] %s747
          %753 = dma.vmem_to_hbm [thread:$0]  %s746, 1024, %s748, %s733, 64, 64, 4
        $region56: #{tpu_custom_call.1} parent=39 // pred_fallthru
          _
      $region40: #{tpu_custom_call.1} parent=5 // pred_fallthru
        _
      %p754 = scmp.le.s32.totalorder 2, %s18
      // Predicated region
      $region57: #{tpu_custom_call.1} parent=5 // pred_check
        %p755 = pneg %p754
      $region58: #{tpu_custom_call.1} parent=5 // pred_check_branch
        %757 = sbr.rel (%p755) target = $region60
      $region59: #{tpu_custom_call.1} parent=5 // pred_region
        %s758 = ssub.s32 %s18, 2
        // Predicated region
        $region61: #{tpu_custom_call.1} parent=59 // pred_check
          %p759 = pneg %p157
        $region62: #{tpu_custom_call.1} parent=59 // pred_check_branch
          %761 = sbr.rel (%p759) target = $region64
        $region63: #{tpu_custom_call.1} parent=59 // pred_region
          %s762 = sand.u32 %s142, 1
          %s763 = scalar_lea.sflag [#allocation4], %s762
          %s764 = sand.u32 %s142, 1
          %s765 = smul.addr %s764, 64
          %s766 = scalar_lea.vmem [#allocation8], %s765
          %768 = dma.done %s763, 1024
        $region64: #{tpu_custom_call.1} parent=59 // pred_fallthru
          _
      $region60: #{tpu_custom_call.1} parent=5 // pred_fallthru
        _
    $region6: #{tpu_custom_call.1} parent=1 // loop_footer
      %s22 = sadd.s32 1, %s18
    $region7: #{tpu_custom_call.1} parent=1 // loop_footer_branch
      %17 = sbr.rel target = $region3
    $region8: #{tpu_custom_call.1} parent=1 // loop_exit
      _
    %769 = vsyncpa [#allocation3], 1
    %s770 = scalar_lea.sflag [#allocation3], 1
    %771 = vsyncpa %s770, 1
    %772 = vsyncpa [#allocation6], 1
    %773 = vsyncpa [#allocation4], 1
    %s774 = scalar_lea.sflag [#allocation4], 1
    %775 = vsyncpa %s774, 1

// kernel: tpu_custom_call.1
$region0: #{tpu_custom_call.1}
  #allocation0 [shape = 'u32[]', space=smem, size = 0x4, offset = 0x4, fixed_abs, tag = 'smem constant byte address 0x4 - core index']
  #allocation1 [shape = 'u32[72,128]{1,0:T(1,128)}', space=vmem, size = 0x9000, scoped, tag = 'internal scratch']
  %s0 = inlined_call_operand.hbm [shape: f32[256,256], index: 0, kind: input, shape index: {}]
  %s1 = inlined_call_operand.hbm [shape: bf16[256,128], index: 1, kind: input, shape index: {}]
  %s2 = inlined_call_operand.vmem [shape: f32[1,128], index: 2, kind: input, shape index: {}]
  %s3 = inlined_call_operand.hbm [shape: bf16[128,128], index: 3, kind: input, shape index: {}]
  %s4 = inlined_call_operand.vmem [shape: f32[1,128], index: 4, kind: input, shape index: {}]
  %s5 = inlined_call_operand.hbm [shape: bf16[256,128], index: 5, kind: output, shape index: {}]
  %s6 = sld [smem:[#allocation0]]
  $region65: #{tpu_custom_call.1} parent=0
    _
  %s8 = ssub.s32 1, %s6
  %s9 = scalar_select 0, %s8, %s6
  $region1: #{tpu_custom_call.1} parent=0
    #allocation2 [shape = 'u8[262144]{0}', space=vmem, size = 0x40000, scoped, tag = 'input window, operand 0']
    #allocation3 [shape = 's32[2]{0}', space=sflag, size = 0x8, scoped, tag = 'scoped memory for tpu_custom_call.1']
    #allocation4 [shape = 's32[2]{0}', space=sflag, size = 0x8, scoped, tag = 'scoped memory for tpu_custom_call.1']
    #allocation5 [shape = 'u8[65536]{0}', space=vmem, size = 0x10000, scoped, tag = 'input window, operand 1, single buffered']
    #allocation6 [shape = 's32[1]{0}', space=sflag, size = 0x4, scoped, tag = 'scoped memory for tpu_custom_call.1']
    #allocation7 [shape = 'u8[32768]{0}', space=vmem, size = 0x8000, scoped, tag = 'input window, operand 3, single buffered']
    #allocation8 [shape = 'u8[65536]{0}', space=vmem, size = 0x10000, scoped, tag = 'output window, operand 0']
    %10 = vsyncpa [#allocation3], 0
    %s11 = scalar_lea.sflag [#allocation3], 1
    %12 = vsyncpa %s11, 0
    %13 = vsyncpa [#allocation6], 0
    %14 = vsyncpa [#allocation4], 0
    %s15 = scalar_lea.sflag [#allocation4], 1
    %16 = vsyncpa %s15, 0
    loop: start=0, step=1, limit=4
    $region2: #{tpu_custom_call.1} parent=1 // loop_pre_header
      _
    $region3: #{tpu_custom_call.1} parent=1 // loop_header
      %s18 = sphi 0, %s22
      %p19 = scmp.ge.s32.totalorder %s18, 4
      %s28 = sphi 0, %s30
      %s31 = sphi 0, %s28
      %s32 = sphi 0, %s31
      %s48 = sphi 0, %s32
      %s52 = sphi 0, %s52
      %s54 = sphi 0, %s52
      %s55 = sphi 0, %s54
      %s69 = sphi 0, %s55
      %s73 = sphi 0, %s73
      %s75 = sphi 0, %s73
      %s76 = sphi 0, %s75
      %s90 = sphi 0, %s76
      %s94 = sphi 0, %s94
      %s96 = sphi 0, %s94
      %s97 = sphi 0, %s96
      %s111 = sphi 0, %s97
      %s115 = sphi 0, %s115
      %s117 = sphi 0, %s115
      %s118 = sphi 0, %s117
      %s132 = sphi 0, %s118
      %s138 = sphi 0, %s140
      %s141 = sphi 0, %s138
      %s142 = sphi 0, %s141
      %s158 = sphi 0, %s142
    $region4: #{tpu_custom_call.1} parent=1 // loop_header_branch
      %21 = sbr.rel (%p19) target = $region8
    $region5: #{tpu_custom_call.1} parent=1 // loop_body
      %s23 = ssub.s32 %s18, 1
      %s24 = ssub.s32 %s18, 2
      %s25 = sadd.s32 %s18, 1
      %s26 = ssub.s32 %s18, %s25
      %p27 = scmp.eq.s32.totalorder %s26, 0
      %s29 = sadd.s32 %s28, 1
      %s30 = scalar_select %p27, %s28, %s29
      %p33 = pneg %p27
      %p34 = scmp.eq.s32.totalorder %s18, 1
      %p35 = por %p33, %p34
      %p36 = scmp.ne.s32.totalorder %s28, %s31
      %p37 = scmp.eq.s32.totalorder %s18, 0
      %p38 = por %p36, %p37
      %p39 = scmp.ne.s32.totalorder %s28, %s31
      %p40 = scmp.eq.s32.totalorder %s23, 1
      %p41 = por %p39, %p40
      %p42 = scmp.ne.s32.totalorder %s31, %s32
      %p43 = scmp.eq.s32.totalorder %s23, 0
      %p44 = por %p42, %p43
      %p45 = scmp.ne.s32.totalorder %s31, %s32
      %p46 = scmp.eq.s32.totalorder %s24, 1
      %p47 = por %p45, %p46
      %p49 = scmp.ne.s32.totalorder %s32, %s48
      %p50 = scmp.eq.s32.totalorder %s24, 0
      %p51 = por %p49, %p50
      %s53 = sadd.s32 %s52, 1
      %p56 = scmp.eq.s32.totalorder %s18, 1
      %p57 = scmp.ne.s32.totalorder %s52, %s54
      %p58 = scmp.eq.s32.totalorder %s18, 0
      %p59 = por %p57, %p58
      %p60 = scmp.ne.s32.totalorder %s52, %s54
      %p61 = scmp.eq.s32.totalorder %s23, 1
      %p62 = por %p60, %p61
      %p63 = scmp.ne.s32.totalorder %s54, %s55
      %p64 = scmp.eq.s32.totalorder %s23, 0
      %p65 = por %p63, %p64
      %p66 = scmp.ne.s32.totalorder %s54, %s55
      %p67 = scmp.eq.s32.totalorder %s24, 1
      %p68 = por %p66, %p67
      %p70 = scmp.ne.s32.totalorder %s55, %s69
      %p71 = scmp.eq.s32.totalorder %s24, 0
      %p72 = por %p70, %p71
      %s74 = sadd.s32 %s73, 1
      %p77 = scmp.eq.s32.totalorder %s18, 1
      %p78 = scmp.ne.s32.totalorder %s73, %s75
      %p79 = scmp.eq.s32.totalorder %s18, 0
      %p80 = por %p78, %p79
      %p81 = scmp.ne.s32.totalorder %s73, %s75
      %p82 = scmp.eq.s32.totalorder %s23, 1
      %p83 = por %p81, %p82
      %p84 = scmp.ne.s32.totalorder %s75, %s76
      %p85 = scmp.eq.s32.totalorder %s23, 0
      %p86 = por %p84, %p85
      %p87 = scmp.ne.s32.totalorder %s75, %s76
      %p88 = scmp.eq.s32.totalorder %s24, 1
      %p89 = por %p87, %p88
      %p91 = scmp.ne.s32.totalorder %s76, %s90
      %p92 = scmp.eq.s32.totalorder %s24, 0
      %p93 = por %p91, %p92
      %s95 = sadd.s32 %s94, 1
      %p98 = scmp.eq.s32.totalorder %s18, 1
      %p99 = scmp.ne.s32.totalorder %s94, %s96
      %p100 = scmp.eq.s32.totalorder %s18, 0
      %p101 = por %p99, %p100
      %p102 = scmp.ne.s32.totalorder %s94, %s96
      %p103 = scmp.eq.s32.totalorder %s23, 1
      %p104 = por %p102, %p103
      %p105 = scmp.ne.s32.totalorder %s96, %s97
      %p106 = scmp.eq.s32.totalorder %s23, 0
      %p107 = por %p105, %p106
      %p108 = scmp.ne.s32.totalorder %s96, %s97
      %p109 = scmp.eq.s32.totalorder %s24, 1
      %p110 = por %p108, %p109
      %p112 = scmp.ne.s32.totalorder %s97, %s111
      %p113 = scmp.eq.s32.totalorder %s24, 0
      %p114 = por %p112, %p113
      %s116 = sadd.s32 %s115, 1
      %p119 = scmp.eq.s32.totalorder %s18, 1
      %p120 = scmp.ne.s32.totalorder %s115, %s117
      %p121 = scmp.eq.s32.totalorder %s18, 0
      %p122 = por %p120, %p121
      %p123 = scmp.ne.s32.totalorder %s115, %s117
      %p124 = scmp.eq.s32.totalorder %s23, 1
      %p125 = por %p123, %p124
      %p126 = scmp.ne.s32.totalorder %s117, %s118
      %p127 = scmp.eq.s32.totalorder %s23, 0
      %p128 = por %p126, %p127
      %p129 = scmp.ne.s32.totalorder %s117, %s118
      %p130 = scmp.eq.s32.totalorder %s24, 1
      %p131 = por %p129, %p130
      %p133 = scmp.ne.s32.totalorder %s118, %s132
      %p134 = scmp.eq.s32.totalorder %s24, 0
      %p135 = por %p133, %p134
      %s136 = ssub.s32 %s18, %s25
      %p137 = scmp.eq.s32.totalorder %s136, 0
      %s139 = sadd.s32 %s138, 1
      %s140 = scalar_select %p137, %s138, %s139
      %p143 = pneg %p137
      %p144 = scmp.eq.s32.totalorder %s18, 1
      %p145 = por %p143, %p144
      %p146 = scmp.ne.s32.totalorder %s138, %s141
      %p147 = scmp.eq.s32.totalorder %s18, 0
      %p148 = por %p146, %p147
      %p149 = scmp.ne.s32.totalorder %s138, %s141
      %p150 = scmp.eq.s32.totalorder %s23, 1
      %p151 = por %p149, %p150
      %p152 = scmp.ne.s32.totalorder %s141, %s142
      %p153 = scmp.eq.s32.totalorder %s23, 0
      %p154 = por %p152, %p153
      %p155 = scmp.ne.s32.totalorder %s141, %s142
      %p156 = scmp.eq.s32.totalorder %s24, 1
      %p157 = por %p155, %p156
      %p159 = scmp.ne.s32.totalorder %s142, %s158
      %p160 = scmp.eq.s32.totalorder %s24, 0
      %p161 = por %p159, %p160
      %p162 = scmp.le.s32.totalorder 1, %s18
      %p163 = scmp.lt.s32.totalorder %s18, 3
      %p164 = pnand %p162, %p163
      %p165 = pneg %p164
      // Predicated region
      $region9: #{tpu_custom_call.1} parent=5 // pred_check
        _
      $region10: #{tpu_custom_call.1} parent=5 // pred_check_branch
        %167 = sbr.rel (%p164) target = $region12
      $region11: #{tpu_custom_call.1} parent=5 // pred_region
        %s168 = ssub.s32 %s18, 1
        // Predicated region
        $region13: #{tpu_custom_call.1} parent=11 // pred_check
          %p169 = pneg %p65
        $region14: #{tpu_custom_call.1} parent=11 // pred_check_branch
          %171 = sbr.rel (%p169) target = $region16
        $region15: #{tpu_custom_call.1} parent=11 // pred_region
          %173 = vsyncadd [#allocation6], 0
          %s174 = sshll.u32 %s1, 4
          %s175 = int_to_ptr.hbm [resolvable:$true] %s174
          %s176 = sshll.u32 [#allocation5], 4
          %s177 = int_to_ptr.vmem [resolvable:$true] %s176
          %182 = dma.hbm_to_vmem [thread:$0]  %s175, 2048, %s177, [#allocation6], 64, 64, 4
        $region16: #{tpu_custom_call.1} parent=11 // pred_fallthru
          _
        // Predicated region
        $region17: #{tpu_custom_call.1} parent=11 // pred_check
          %p183 = pneg %p86
        $region18: #{tpu_custom_call.1} parent=11 // pred_check_branch
          %185 = sbr.rel (%p183) target = $region20
        $region19: #{tpu_custom_call.1} parent=11 // pred_region
          _
        $region20: #{tpu_custom_call.1} parent=11 // pred_fallthru
          _
        // Predicated region
        $region21: #{tpu_custom_call.1} parent=11 // pred_check
          %p186 = pneg %p107
        $region22: #{tpu_custom_call.1} parent=11 // pred_check_branch
          %188 = sbr.rel (%p186) target = $region24
        $region23: #{tpu_custom_call.1} parent=11 // pred_region
          %190 = vsyncadd [#allocation6], 0
          %s191 = sshll.u32 %s3, 4
          %s192 = int_to_ptr.hbm [resolvable:$true] %s191
          %s193 = sshll.u32 [#allocation7], 4
          %s194 = int_to_ptr.vmem [resolvable:$true] %s193
          %199 = dma.hbm_to_vmem [thread:$0]  %s192, 1024, %s194, [#allocation6], 64, 64, 4
        $region24: #{tpu_custom_call.1} parent=11 // pred_fallthru
          _
        // Predicated region
        $region25: #{tpu_custom_call.1} parent=11 // pred_check
          %p200 = pneg %p128
        $region26: #{tpu_custom_call.1} parent=11 // pred_check_branch
          %202 = sbr.rel (%p200) target = $region28
        $region27: #{tpu_custom_call.1} parent=11 // pred_region
          _
        $region28: #{tpu_custom_call.1} parent=11 // pred_fallthru
          _
      $region12: #{tpu_custom_call.1} parent=5 // pred_fallthru
        _
      %p203 = scmp.lt.s32.totalorder %s18, 2
      // Predicated region
      $region29: #{tpu_custom_call.1} parent=5 // pred_check
        %p204 = pneg %p203
      $region30: #{tpu_custom_call.1} parent=5 // pred_check_branch
        %206 = sbr.rel (%p204) target = $region32
      $region31: #{tpu_custom_call.1} parent=5 // pred_region
        // Predicated region
        $region33: #{tpu_custom_call.1} parent=31 // pred_check
          %p207 = pneg %p38
        $region34: #{tpu_custom_call.1} parent=31 // pred_check_branch
          %209 = sbr.rel (%p207) target = $region36
        $region35: #{tpu_custom_call.1} parent=31 // pred_region
          %s210 = sand.u32 %s28, 1
          %s211 = scalar_lea.sflag [#allocation3], %s210
          %s212 = sand.u32 %s28, 1
          %s213 = smul.addr %s212, 256
          %s214 = scalar_lea.vmem [#allocation2], %s213
          %s215 = smul.u32 16, %s18
          %217 = vsyncadd %s211, 0
          %s218 = smul.addr %s215, 2
          %s219 = smul.addr %s218, 8
          %s220 = scalar_lea.hbm %s0, %s219
          %s221 = sshll.u32 %s220, 4
          %s222 = int_to_ptr.hbm [resolvable:$true] %s221
          %s223 = sshll.u32 %s214, 4
          %s224 = int_to_ptr.vmem [resolvable:$true] %s223
          %229 = dma.hbm_to_vmem [thread:$0]  %s222, 4096, %s224, %s211, 256, 256, 16
        $region36: #{tpu_custom_call.1} parent=31 // pred_fallthru
          _
      $region32: #{tpu_custom_call.1} parent=5 // pred_fallthru
        _
      %p230 = scmp.le.s32.totalorder 1, %s18
      %p231 = scmp.lt.s32.totalorder %s18, 3
      %p232 = pnand %p230, %p231
      %p233 = pneg %p232
      // Predicated region
      $region37: #{tpu_custom_call.1} parent=5 // pred_check
        _
      $region38: #{tpu_custom_call.1} parent=5 // pred_check_branch
        %235 = sbr.rel (%p232) target = $region40
      $region39: #{tpu_custom_call.1} parent=5 // pred_region
        %s236 = ssub.s32 %s18, 1
        %s237 = sand.u32 %s31, 1
        %s238 = scalar_lea.sflag [#allocation3], %s237
        %s239 = sand.u32 %s31, 1
        %s240 = smul.addr %s239, 256
        %s241 = scalar_lea.vmem [#allocation2], %s240
        // Predicated region
        $region41: #{tpu_custom_call.1} parent=39 // pred_check
          %p242 = pneg %p44
        $region42: #{tpu_custom_call.1} parent=39 // pred_check_branch
          %244 = sbr.rel (%p242) target = $region44
        $region43: #{tpu_custom_call.1} parent=39 // pred_region
          %246 = dma.done %s238, 4096
        $region44: #{tpu_custom_call.1} parent=39 // pred_fallthru
          _
        // Predicated region
        $region45: #{tpu_custom_call.1} parent=39 // pred_check
          %p247 = pneg %p65
        $region46: #{tpu_custom_call.1} parent=39 // pred_check_branch
          %249 = sbr.rel (%p247) target = $region48
        $region47: #{tpu_custom_call.1} parent=39 // pred_region
          %251 = dma.done [#allocation6], 2048
        $region48: #{tpu_custom_call.1} parent=39 // pred_fallthru
          _
        // Predicated region
        $region49: #{tpu_custom_call.1} parent=39 // pred_check
          %p252 = pneg %p107
        $region50: #{tpu_custom_call.1} parent=39 // pred_check_branch
          %254 = sbr.rel (%p252) target = $region52
        $region51: #{tpu_custom_call.1} parent=39 // pred_region
          %256 = dma.done [#allocation6], 1024
        $region52: #{tpu_custom_call.1} parent=39 // pred_fallthru
          _
        %s257 = sand.u32 %s31, 1
        %s258 = scalar_lea.sflag [#allocation3], %s257
        %s259 = sand.u32 %s31, 1
        %s260 = smul.addr %s259, 256
        %s261 = scalar_lea.vmem [#allocation2], %s260
        %p262 = pneg %p44
        %p263 = pneg %p41
        %p264 = pneg %p65
        %p265 = pneg %p62
        %p266 = pneg %p86
        %p267 = pneg %p83
        %p268 = pneg %p107
        %p269 = pneg %p104
        %p270 = pneg %p128
        %p271 = pneg %p125
        %p272 = pneg %p154
        %p273 = pneg %p151
        %s274 = sand.u32 %s141, 1
        %s275 = scalar_lea.sflag [#allocation4], %s274
        %s276 = sand.u32 %s141, 1
        %s277 = smul.addr %s276, 64
        %s278 = scalar_lea.vmem [#allocation8], %s277
        %s279 = smul.u32 16, %s23
        %s280 = smul.u32 16, %s23
        %v281 = vld [vmem:[%s241] sm:$0xff]
        %v282 = vld [vmem:[%s241 + $0x8] sm:$0xff]
        %v283 = vld [vmem:[%s241 + $0x10] sm:$0xff]
        %v284 = vld [vmem:[%s241 + $0x18] sm:$0xff]
        %v285 = vld [vmem:[%s241 + $0x20] sm:$0xff]
        %v286 = vld [vmem:[%s241 + $0x28] sm:$0xff]
        %v287 = vld [vmem:[%s241 + $0x30] sm:$0xff]
        %v288 = vld [vmem:[%s241 + $0x38] sm:$0xff]
        %v289 = vld [vmem:[%s241 + $0x40] sm:$0xff]
        %v290 = vld [vmem:[%s241 + $0x48] sm:$0xff]
        %v291 = vld [vmem:[%s241 + $0x50] sm:$0xff]
        %v292 = vld [vmem:[%s241 + $0x58] sm:$0xff]
        %v293 = vld [vmem:[%s241 + $0x60] sm:$0xff]
        %v294 = vld [vmem:[%s241 + $0x68] sm:$0xff]
        %v295 = vld [vmem:[%s241 + $0x70] sm:$0xff]
        %v296 = vld [vmem:[%s241 + $0x78] sm:$0xff]
        %v297 = vld [vmem:[%s241 + $0x80] sm:$0xff]
        %v298 = vld [vmem:[%s241 + $0x88] sm:$0xff]
        %v299 = vld [vmem:[%s241 + $0x90] sm:$0xff]
        %v300 = vld [vmem:[%s241 + $0x98] sm:$0xff]
        %v301 = vld [vmem:[%s241 + $0xa0] sm:$0xff]
        %v302 = vld [vmem:[%s241 + $0xa8] sm:$0xff]
        %v303 = vld [vmem:[%s241 + $0xb0] sm:$0xff]
        %v304 = vld [vmem:[%s241 + $0xb8] sm:$0xff]
        %v305 = vld [vmem:[%s241 + $0xc0] sm:$0xff]
        %v306 = vld [vmem:[%s241 + $0xc8] sm:$0xff]
        %v307 = vld [vmem:[%s241 + $0xd0] sm:$0xff]
        %v308 = vld [vmem:[%s241 + $0xd8] sm:$0xff]
        %v309 = vld [vmem:[%s241 + $0xe0] sm:$0xff]
        %v310 = vld [vmem:[%s241 + $0xe8] sm:$0xff]
        %v311 = vld [vmem:[%s241 + $0xf0] sm:$0xff]
        %v312 = vld [vmem:[%s241 + $0xf8] sm:$0xff]
        %v313 = vpack.c.bf16 %v283, %v281
        %v314 = vpack.c.bf16 %v284, %v282
        %v315 = vpack.c.bf16 %v287, %v285
        %v316 = vpack.c.bf16 %v288, %v286
        %v317 = vpack.c.bf16 %v291, %v289
        %v318 = vpack.c.bf16 %v292, %v290
        %v319 = vpack.c.bf16 %v295, %v293
        %v320 = vpack.c.bf16 %v296, %v294
        %v321 = vpack.c.bf16 %v299, %v297
        %v322 = vpack.c.bf16 %v300, %v298
        %v323 = vpack.c.bf16 %v303, %v301
        %v324 = vpack.c.bf16 %v304, %v302
        %v325 = vpack.c.bf16 %v307, %v305
        %v326 = vpack.c.bf16 %v308, %v306
        %v327 = vpack.c.bf16 %v311, %v309
        %v328 = vpack.c.bf16 %v312, %v310
        %v329 = vld [vmem:[#allocation5] sm:$0xf]
        %v330 = vld [vmem:[#allocation5 + $0x4] sm:$0xf]
        %v331 = vld [vmem:[#allocation5 + $0x8] sm:$0xf]
        %v332 = vld [vmem:[#allocation5 + $0xc] sm:$0xf]
        %v333 = vld [vmem:[#allocation5 + $0x10] sm:$0xf]
        %v334 = vld [vmem:[#allocation5 + $0x14] sm:$0xf]
        %v335 = vld [vmem:[#allocation5 + $0x18] sm:$0xf]
        %v336 = vld [vmem:[#allocation5 + $0x1c] sm:$0xf]
        %v337 = vld [vmem:[#allocation5 + $0x20] sm:$0xf]
        %v338 = vld [vmem:[#allocation5 + $0x24] sm:$0xf]
        %v339 = vld [vmem:[#allocation5 + $0x28] sm:$0xf]
        %v340 = vld [vmem:[#allocation5 + $0x2c] sm:$0xf]
        %v341 = vld [vmem:[#allocation5 + $0x30] sm:$0xf]
        %v342 = vld [vmem:[#allocation5 + $0x34] sm:$0xf]
        %v343 = vld [vmem:[#allocation5 + $0x38] sm:$0xf]
        %v344 = vld [vmem:[#allocation5 + $0x3c] sm:$0xf]
        %v345 = vld [vmem:[#allocation5 + $0x40] sm:$0xf]
        %v346 = vld [vmem:[#allocation5 + $0x44] sm:$0xf]
        %v347 = vld [vmem:[#allocation5 + $0x48] sm:$0xf]
        %v348 = vld [vmem:[#allocation5 + $0x4c] sm:$0xf]
        %v349 = vld [vmem:[#allocation5 + $0x50] sm:$0xf]
        %v350 = vld [vmem:[#allocation5 + $0x54] sm:$0xf]
        %v351 = vld [vmem:[#allocation5 + $0x58] sm:$0xf]
        %v352 = vld [vmem:[#allocation5 + $0x5c] sm:$0xf]
        %v353 = vld [vmem:[#allocation5 + $0x60] sm:$0xf]
        %v354 = vld [vmem:[#allocation5 + $0x64] sm:$0xf]
        %v355 = vld [vmem:[#allocation5 + $0x68] sm:$0xf]
        %v356 = vld [vmem:[#allocation5 + $0x6c] sm:$0xf]
        %v357 = vld [vmem:[#allocation5 + $0x70] sm:$0xf]
        %v358 = vld [vmem:[#allocation5 + $0x74] sm:$0xf]
        %v359 = vld [vmem:[#allocation5 + $0x78] sm:$0xf]
        %v360 = vld [vmem:[#allocation5 + $0x7c] sm:$0xf]
        %v361 = vld [vmem:[%s2] sm:$0x1]
        %v363 = vperm.slane %v361, 0
        %v397 = vunpack.c.l.b16 %v329
        %v398 = vunpack.c.l.b16 %v330
        %v399 = vunpack.c.l.b16 %v331
        %v400 = vunpack.c.l.b16 %v332
        %v401 = vunpack.c.l.b16 %v333
        %v402 = vunpack.c.l.b16 %v334
        %v403 = vunpack.c.l.b16 %v335
        %v404 = vunpack.c.l.b16 %v336
        %v405 = vunpack.c.l.b16 %v337
        %v406 = vunpack.c.l.b16 %v338
        %v407 = vunpack.c.l.b16 %v339
        %v408 = vunpack.c.l.b16 %v340
        %v409 = vunpack.c.l.b16 %v341
        %v410 = vunpack.c.l.b16 %v342
        %v411 = vunpack.c.l.b16 %v343
        %v412 = vunpack.c.l.b16 %v344
        %v413 = vunpack.c.l.b16 %v345
        %v414 = vunpack.c.l.b16 %v346
        %v415 = vunpack.c.l.b16 %v347
        %v416 = vunpack.c.l.b16 %v348
        %v417 = vunpack.c.l.b16 %v349
        %v418 = vunpack.c.l.b16 %v350
        %v419 = vunpack.c.l.b16 %v351
        %v420 = vunpack.c.l.b16 %v352
        %v421 = vunpack.c.l.b16 %v353
        %v422 = vunpack.c.l.b16 %v354
        %v423 = vunpack.c.l.b16 %v355
        %v424 = vunpack.c.l.b16 %v356
        %v425 = vunpack.c.l.b16 %v357
        %v426 = vunpack.c.l.b16 %v358
        %v427 = vunpack.c.l.b16 %v359
        %v428 = vunpack.c.l.b16 %v360
        %v429 = vpack.c.b16 %v398, %v397
        %v430 = vpack.c.b16 %v400, %v399
        %v431 = vpack.c.b16 %v402, %v401
        %v432 = vpack.c.b16 %v404, %v403
        %v433 = vpack.c.b16 %v406, %v405
        %v434 = vpack.c.b16 %v408, %v407
        %v435 = vpack.c.b16 %v410, %v409
        %v436 = vpack.c.b16 %v412, %v411
        %v437 = vpack.c.b16 %v414, %v413
        %v438 = vpack.c.b16 %v416, %v415
        %v439 = vpack.c.b16 %v418, %v417
        %v440 = vpack.c.b16 %v420, %v419
        %v441 = vpack.c.b16 %v422, %v421
        %v442 = vpack.c.b16 %v424, %v423
        %v443 = vpack.c.b16 %v426, %v425
        %v444 = vpack.c.b16 %v428, %v427
        %461 = vmatpush.bf16.msra.mxu0 %v436
        %462 = vmatpush.bf16.msra.mxu0 %v435
        %463 = vmatpush.bf16.msra.mxu0 %v434
        %464 = vmatpush.bf16.msra.mxu0 %v433
        %465 = vmatpush.bf16.msra.mxu0 %v432
        %466 = vmatpush.bf16.msra.mxu0 %v431
        %467 = vmatpush.bf16.msra.mxu0 %v430
        %468 = vmatpush.bf16.msra.mxu0 %v429
        %469 = vmatmul.bf16.gmra.mxu0 %v313
        %v470 = vpop.f32.mrf.mxu0
        %v471 = vadd.f32 %v363, %v470
        %v472 = vpop.f32.mrf.mxu0
        %v473 = vadd.f32 %v363, %v472
        %474 = vmatmul.bf16.gmra.mxu0 %v315
        %v475 = vpop.f32.mrf.mxu0
        %v476 = vadd.f32 %v363, %v475
        %v477 = vpop.f32.mrf.mxu0
        %v478 = vadd.f32 %v363, %v477
        %479 = vmatmul.bf16.gmra.mxu0 %v317
        %v480 = vpop.f32.mrf.mxu0
        %v481 = vadd.f32 %v363, %v480
        %v482 = vpop.f32.mrf.mxu0
        %v483 = vadd.f32 %v363, %v482
        %484 = vmatmul.bf16.gmra.mxu0 %v319
        %v485 = vpop.f32.mrf.mxu0
        %v486 = vadd.f32 %v363, %v485
        %v487 = vpop.f32.mrf.mxu0
        %v488 = vadd.f32 %v363, %v487
        %489 = vmatmul.bf16.gmra.mxu0 %v321
        %v490 = vpop.f32.mrf.mxu0
        %v491 = vadd.f32 %v363, %v490
        %v492 = vpop.f32.mrf.mxu0
        %v493 = vadd.f32 %v363, %v492
        %494 = vmatmul.bf16.gmra.mxu0 %v323
        %v495 = vpop.f32.mrf.mxu0
        %v496 = vadd.f32 %v363, %v495
        %v497 = vpop.f32.mrf.mxu0
        %v498 = vadd.f32 %v363, %v497
        %499 = vmatmul.bf16.gmra.mxu0 %v325
        %v500 = vpop.f32.mrf.mxu0
        %v501 = vadd.f32 %v363, %v500
        %v502 = vpop.f32.mrf.mxu0
        %v503 = vadd.f32 %v363, %v502
        %504 = vmatmul.bf16.gmra.mxu0 %v327
        %v505 = vpop.f32.mrf.mxu0
        %v506 = vadd.f32 %v363, %v505
        %v507 = vpop.f32.mrf.mxu0
        %v508 = vadd.f32 %v363, %v507
        %509 = vdwg.mxu0
        %510 = vmatpush.bf16.msra.mxu0 %v444
        %511 = vmatpush.bf16.msra.mxu0 %v443
        %512 = vmatpush.bf16.msra.mxu0 %v442
        %513 = vmatpush.bf16.msra.mxu0 %v441
        %514 = vmatpush.bf16.msra.mxu0 %v440
        %515 = vmatpush.bf16.msra.mxu0 %v439
        %516 = vmatpush.bf16.msra.mxu0 %v438
        %517 = vmatpush.bf16.msra.mxu0 %v437
        %518 = vmatmul.bf16.gmra.mxu0 %v314
        %v519 = vpop.f32.mrf.mxu0
        %v520 = vadd.f32 %v471, %v519
        %v521 = vpop.f32.mrf.mxu0
        %v522 = vadd.f32 %v473, %v521
        %523 = vmatmul.bf16.gmra.mxu0 %v316
        %v524 = vpop.f32.mrf.mxu0
        %v525 = vadd.f32 %v476, %v524
        %v526 = vpop.f32.mrf.mxu0
        %v527 = vadd.f32 %v478, %v526
        %528 = vmatmul.bf16.gmra.mxu0 %v318
        %v529 = vpop.f32.mrf.mxu0
        %v530 = vadd.f32 %v481, %v529
        %v531 = vpop.f32.mrf.mxu0
        %v532 = vadd.f32 %v483, %v531
        %533 = vmatmul.bf16.gmra.mxu0 %v320
        %v534 = vpop.f32.mrf.mxu0
        %v535 = vadd.f32 %v486, %v534
        %v536 = vpop.f32.mrf.mxu0
        %v537 = vadd.f32 %v488, %v536
        %538 = vmatmul.bf16.gmra.mxu0 %v322
        %v539 = vpop.f32.mrf.mxu0
        %v540 = vadd.f32 %v491, %v539
        %v541 = vpop.f32.mrf.mxu0
        %v542 = vadd.f32 %v493, %v541
        %543 = vmatmul.bf16.gmra.mxu0 %v324
        %v544 = vpop.f32.mrf.mxu0
        %v545 = vadd.f32 %v496, %v544
        %v546 = vpop.f32.mrf.mxu0
        %v547 = vadd.f32 %v498, %v546
        %548 = vmatmul.bf16.gmra.mxu0 %v326
        %v549 = vpop.f32.mrf.mxu0
        %v550 = vadd.f32 %v501, %v549
        %v551 = vpop.f32.mrf.mxu0
        %v552 = vadd.f32 %v503, %v551
        %553 = vmatmul.bf16.gmra.mxu0 %v328
        %v554 = vpop.f32.mrf.mxu0
        %v555 = vadd.f32 %v506, %v554
        %v556 = vpop.f32.mrf.mxu0
        %v557 = vadd.f32 %v508, %v556
        %558 = vdwg.mxu0
        %v559 = vmax.f32 %v520, 0.0
        %v560 = vmax.f32 %v522, 0.0
        %v561 = vmax.f32 %v525, 0.0
        %v562 = vmax.f32 %v527, 0.0
        %v563 = vmax.f32 %v530, 0.0
        %v564 = vmax.f32 %v532, 0.0
        %v565 = vmax.f32 %v535, 0.0
        %v566 = vmax.f32 %v537, 0.0
        %v567 = vmax.f32 %v540, 0.0
        %v568 = vmax.f32 %v542, 0.0
        %v569 = vmax.f32 %v545, 0.0
        %v570 = vmax.f32 %v547, 0.0
        %v571 = vmax.f32 %v550, 0.0
        %v572 = vmax.f32 %v552, 0.0
        %v573 = vmax.f32 %v555, 0.0
        %v574 = vmax.f32 %v557, 0.0
        %v575 = vpack.c.bf16 %v560, %v559
        %v576 = vpack.c.bf16 %v562, %v561
        %v577 = vpack.c.bf16 %v564, %v563
        %v578 = vpack.c.bf16 %v566, %v565
        %v579 = vpack.c.bf16 %v568, %v567
        %v580 = vpack.c.bf16 %v570, %v569
        %v581 = vpack.c.bf16 %v572, %v571
        %v582 = vpack.c.bf16 %v574, %v573
        %v583 = vld [vmem:[#allocation7] sm:$0xf]
        %v584 = vld [vmem:[#allocation7 + $0x4] sm:$0xf]
        %v585 = vld [vmem:[#allocation7 + $0x8] sm:$0xf]
        %v586 = vld [vmem:[#allocation7 + $0xc] sm:$0xf]
        %v587 = vld [vmem:[#allocation7 + $0x10] sm:$0xf]
        %v588 = vld [vmem:[#allocation7 + $0x14] sm:$0xf]
        %v589 = vld [vmem:[#allocation7 + $0x18] sm:$0xf]
        %v590 = vld [vmem:[#allocation7 + $0x1c] sm:$0xf]
        %v591 = vld [vmem:[#allocation7 + $0x20] sm:$0xf]
        %v592 = vld [vmem:[#allocation7 + $0x24] sm:$0xf]
        %v593 = vld [vmem:[#allocation7 + $0x28] sm:$0xf]
        %v594 = vld [vmem:[#allocation7 + $0x2c] sm:$0xf]
        %v595 = vld [vmem:[#allocation7 + $0x30] sm:$0xf]
        %v596 = vld [vmem:[#allocation7 + $0x34] sm:$0xf]
        %v597 = vld [vmem:[#allocation7 + $0x38] sm:$0xf]
        %v598 = vld [vmem:[#allocation7 + $0x3c] sm:$0xf]
        %v599 = vld [vmem:[%s4] sm:$0x1]
        %v601 = vperm.slane %v599, 0
        %v619 = vunpack.c.l.b16 %v583
        %v620 = vunpack.c.l.b16 %v584
        %v621 = vunpack.c.l.b16 %v585
        %v622 = vunpack.c.l.b16 %v586
        %v623 = vunpack.c.l.b16 %v587
        %v624 = vunpack.c.l.b16 %v588
        %v625 = vunpack.c.l.b16 %v589
        %v626 = vunpack.c.l.b16 %v590
        %v627 = vunpack.c.l.b16 %v591
        %v628 = vunpack.c.l.b16 %v592
        %v629 = vunpack.c.l.b16 %v593
        %v630 = vunpack.c.l.b16 %v594
        %v631 = vunpack.c.l.b16 %v595
        %v632 = vunpack.c.l.b16 %v596
        %v633 = vunpack.c.l.b16 %v597
        %v634 = vunpack.c.l.b16 %v598
        %v635 = vpack.c.b16 %v620, %v619
        %v636 = vpack.c.b16 %v622, %v621
        %v637 = vpack.c.b16 %v624, %v623
        %v638 = vpack.c.b16 %v626, %v625
        %v639 = vpack.c.b16 %v628, %v627
        %v640 = vpack.c.b16 %v630, %v629
        %v641 = vpack.c.b16 %v632, %v631
        %v642 = vpack.c.b16 %v634, %v633
        %651 = vmatpush.bf16.msra.mxu0 %v642
        %652 = vmatpush.bf16.msra.mxu0 %v641
        %653 = vmatpush.bf16.msra.mxu0 %v640
        %654 = vmatpush.bf16.msra.mxu0 %v639
        %655 = vmatpush.bf16.msra.mxu0 %v638
        %656 = vmatpush.bf16.msra.mxu0 %v637
        %657 = vmatpush.bf16.msra.mxu0 %v636
        %658 = vmatpush.bf16.msra.mxu0 %v635
        %659 = vmatmul.bf16.gmra.mxu0 %v575
        %v660 = vpop.f32.mrf.mxu0
        %v661 = vadd.f32 %v601, %v660
        %v662 = vpop.f32.mrf.mxu0
        %v663 = vadd.f32 %v601, %v662
        %664 = vmatmul.bf16.gmra.mxu0 %v576
        %v665 = vpop.f32.mrf.mxu0
        %v666 = vadd.f32 %v601, %v665
        %v667 = vpop.f32.mrf.mxu0
        %v668 = vadd.f32 %v601, %v667
        %669 = vmatmul.bf16.gmra.mxu0 %v577
        %v670 = vpop.f32.mrf.mxu0
        %v671 = vadd.f32 %v601, %v670
        %v672 = vpop.f32.mrf.mxu0
        %v673 = vadd.f32 %v601, %v672
        %674 = vmatmul.bf16.gmra.mxu0 %v578
        %v675 = vpop.f32.mrf.mxu0
        %v676 = vadd.f32 %v601, %v675
        %v677 = vpop.f32.mrf.mxu0
        %v678 = vadd.f32 %v601, %v677
        %679 = vmatmul.bf16.gmra.mxu0 %v579
        %v680 = vpop.f32.mrf.mxu0
        %v681 = vadd.f32 %v601, %v680
        %v682 = vpop.f32.mrf.mxu0
        %v683 = vadd.f32 %v601, %v682
        %684 = vmatmul.bf16.gmra.mxu0 %v580
        %v685 = vpop.f32.mrf.mxu0
        %v686 = vadd.f32 %v601, %v685
        %v687 = vpop.f32.mrf.mxu0
        %v688 = vadd.f32 %v601, %v687
        %689 = vmatmul.bf16.gmra.mxu0 %v581
        %v690 = vpop.f32.mrf.mxu0
        %v691 = vadd.f32 %v601, %v690
        %v692 = vpop.f32.mrf.mxu0
        %v693 = vadd.f32 %v601, %v692
        %694 = vmatmul.bf16.gmra.mxu0 %v582
        %v695 = vpop.f32.mrf.mxu0
        %v696 = vadd.f32 %v601, %v695
        %v697 = vpop.f32.mrf.mxu0
        %v698 = vadd.f32 %v601, %v697
        %699 = vdwg.mxu0
        %v700 = vpack.c.bf16 %v661, %v661
        %v701 = vpack.c.bf16 %v663, %v663
        %v702 = vpack.c.bf16 %v666, %v666
        %v703 = vpack.c.bf16 %v668, %v668
        %v704 = vpack.c.bf16 %v671, %v671
        %v705 = vpack.c.bf16 %v673, %v673
        %v706 = vpack.c.bf16 %v676, %v676
        %v707 = vpack.c.bf16 %v678, %v678
        %v708 = vpack.c.bf16 %v681, %v681
        %v709 = vpack.c.bf16 %v683, %v683
        %v710 = vpack.c.bf16 %v686, %v686
        %v711 = vpack.c.bf16 %v688, %v688
        %v712 = vpack.c.bf16 %v691, %v691
        %v713 = vpack.c.bf16 %v693, %v693
        %v714 = vpack.c.bf16 %v696, %v696
        %v715 = vpack.c.bf16 %v698, %v698
        %716 = vst [vmem:[%s278] sm:$0xf] %v700
        %717 = vst [vmem:[%s278 + $0x4] sm:$0xf] %v701
        %718 = vst [vmem:[%s278 + $0x8] sm:$0xf] %v702
        %719 = vst [vmem:[%s278 + $0xc] sm:$0xf] %v703
        %720 = vst [vmem:[%s278 + $0x10] sm:$0xf] %v704
        %721 = vst [vmem:[%s278 + $0x14] sm:$0xf] %v705
        %722 = vst [vmem:[%s278 + $0x18] sm:$0xf] %v706
        %723 = vst [vmem:[%s278 + $0x1c] sm:$0xf] %v707
        %724 = vst [vmem:[%s278 + $0x20] sm:$0xf] %v708
        %725 = vst [vmem:[%s278 + $0x24] sm:$0xf] %v709
        %726 = vst [vmem:[%s278 + $0x28] sm:$0xf] %v710
        %727 = vst [vmem:[%s278 + $0x2c] sm:$0xf] %v711
        %728 = vst [vmem:[%s278 + $0x30] sm:$0xf] %v712
        %729 = vst [vmem:[%s278 + $0x34] sm:$0xf] %v713
        %730 = vst [vmem:[%s278 + $0x38] sm:$0xf] %v714
        %731 = vst [vmem:[%s278 + $0x3c] sm:$0xf] %v715
        %s732 = sand.u32 %s141, 1
        %s733 = scalar_lea.sflag [#allocation4], %s732
        %s734 = sand.u32 %s141, 1
        %s735 = smul.addr %s734, 64
        %s736 = scalar_lea.vmem [#allocation8], %s735
        // Predicated region
        $region53: #{tpu_custom_call.1} parent=39 // pred_check
          %p737 = pneg %p151
        $region54: #{tpu_custom_call.1} parent=39 // pred_check_branch
          %739 = sbr.rel (%p737) target = $region56
        $region55: #{tpu_custom_call.1} parent=39 // pred_region
          %s740 = smul.u32 16, %s23
          %742 = vsyncadd %s733, 0
          %s743 = smul.addr %s740, 4
          %s744 = scalar_lea.hbm %s5, %s743
          %s745 = sshll.u32 %s736, 4
          %s746 = int_to_ptr.vmem [resolvable:$true] %s745
          %s747 = sshll.u32 %s744, 4
          %s748 = int_to_ptr.hbm [resolvable:$true] %s747
          %753 = dma.vmem_to_hbm [thread:$0]  %s746, 1024, %s748, %s733, 64, 64, 4
        $region56: #{tpu_custom_call.1} parent=39 // pred_fallthru
          _
      $region40: #{tpu_custom_call.1} parent=5 // pred_fallthru
        _
      %p754 = scmp.le.s32.totalorder 2, %s18
      // Predicated region
      $region57: #{tpu_custom_call.1} parent=5 // pred_check
        %p755 = pneg %p754
      $region58: #{tpu_custom_call.1} parent=5 // pred_check_branch
        %757 = sbr.rel (%p755) target = $region60
      $region59: #{tpu_custom_call.1} parent=5 // pred_region
        %s758 = ssub.s32 %s18, 2
        // Predicated region
        $region61: #{tpu_custom_call.1} parent=59 // pred_check
          %p759 = pneg %p157
        $region62: #{tpu_custom_call.1} parent=59 // pred_check_branch
          %761 = sbr.rel (%p759) target = $region64
        $region63: #{tpu_custom_call.1} parent=59 // pred_region
          %s762 = sand.u32 %s142, 1
          %s763 = scalar_lea.sflag [#allocation4], %s762
          %s764 = sand.u32 %s142, 1
          %s765 = smul.addr %s764, 64
          %s766 = scalar_lea.vmem [#allocation8], %s765
          %768 = dma.done %s763, 1024
        $region64: #{tpu_custom_call.1} parent=59 // pred_fallthru
          _
      $region60: #{tpu_custom_call.1} parent=5 // pred_fallthru
        _
    $region6: #{tpu_custom_call.1} parent=1 // loop_footer
      %s22 = sadd.s32 1, %s18
    $region7: #{tpu_custom_call.1} parent=1 // loop_footer_branch
      %17 = sbr.rel target = $region3
    $region8: #{tpu_custom_call.1} parent=1 // loop_exit
      _
    %769 = vsyncpa [#allocation3], 1
    %s770 = scalar_lea.sflag [#allocation3], 1
    %771 = vsyncpa %s770, 1
    %772 = vsyncpa [#allocation6], 1
    %773 = vsyncpa [#allocation4], 1
    %s774 = scalar_lea.sflag [#allocation4], 1
    %775 = vsyncpa %s774, 1

</llo_original>
